<compile_context>
chip_gen: v7x
topology: tpu7x:2x2x1
jax: 0.10.0
libtpu: 0.0.40
codegen_flags: <defaults>
</compile_context>

<pallas_src>
import jax
import jax.numpy as jnp
from jax.experimental import pallas as pl
from jax.experimental.pallas import tpu as pltpu

TEXT_FEAT = 768      # BERT CLS hidden size (fixed by module)
IMAGE_FEAT = 2048    # ResNet-152 pooled feature size (fixed by module)
OUT_DIM = 3          # 3-way logits per branch
HEAD_W = 3 * OUT_DIM  # 9 logits total (fusion | text | image)
LOGITS_PAD = 128     # lane-dense packed-logits width


def self_mm_forward(image_hidden_state, text_hidden_state, kp):
    """mode == 'all' forward of SELF_MM given backbone pooled features.

    kp: packed kernel params from make_params()[0].
    """
    B = image_hidden_state.shape[0]
    # Derive the (static) branch hidden dims from the packed slab shapes.
    n_if = kp["w_img"].shape[1]       # image_dim + fusion_dim
    n_tf = kp["w_txt"].shape[1]       # text_dim  + fusion_dim
    n_all = kp["w2"].shape[1]         # fusion_dim + text_dim + image_dim
    F = n_if + n_tf - n_all           # fusion_dim
    I = n_if - F                      # image_dim
    T = n_tf - F                      # text_dim

    f32 = jnp.float32
    bf16 = jnp.bfloat16

    def kernel(img_ref, txt_ref, w_img_ref, w_txt_ref, w2_ref, w3_ref, b_ref,
               text_h_ref, image_h_ref, logits_ref):
        img = img_ref[...]                                   # (B, 2048) bf16
        txt = txt_ref[...]                                   # (B, 768)  bf16

        # ---- layer 1: one wide (N = branch+fusion) matmul per LHS --------
        # Lane layout: [image-branch | fusion-img-part], [text-branch | fusion-txt-part].
        u_img = (jnp.dot(img, w_img_ref[...], preferred_element_type=f32)
                 + b_ref[0:1, 0:I + F])                      # bias row0 = [ib1 | fb1]
        u_txt = (jnp.dot(txt, w_txt_ref[...], preferred_element_type=f32)
                 + b_ref[1:2, 0:T + F])                      # bias row1 = [tb1 | 0]

        i_h1 = jnp.maximum(u_img[:, 0:I], 0.0)
        t_h1 = jnp.maximum(u_txt[:, 0:T], 0.0)
        f_h1 = jnp.maximum(u_img[:, I:] + u_txt[:, T:], 0.0)  # fusion b1 already in row0
        image_h_ref[...] = i_h1
        text_h_ref[...] = t_h1

        # ---- layer 2: three dots against lane-slices of ONE packed W2 slab
        z2_f = jnp.dot(f_h1.astype(bf16), w2_ref[0:F, 0:F],
                       preferred_element_type=f32)
        z2_t = jnp.dot(t_h1.astype(bf16), w2_ref[0:T, F:F + T],
                       preferred_element_type=f32)
        z2_i = jnp.dot(i_h1.astype(bf16), w2_ref[0:I, F + T:F + T + I],
                       preferred_element_type=f32)
        h2 = jnp.maximum(jnp.concatenate([z2_f, z2_t, z2_i], axis=-1)
                         + b_ref[2:3, 0:F + T + I], 0.0)

        # ---- layer 3: single combined head -> lane-dense (B, 128) logits --
        # lanes: fusion [0:3] | text [3:6] | image [6:9] (rest exactly zero).
        logits_ref[...] = (jnp.dot(h2.astype(bf16), w3_ref[...],
                                   preferred_element_type=f32)
                           + b_ref[3:4, 0:LOGITS_PAD])

    # Host-side cast: halve activation DMA bytes (LHS is bf16-rounded anyway).
    img_bf = image_hidden_state.astype(bf16)
    txt_bf = text_hidden_state.astype(bf16)
    args = (img_bf, txt_bf, kp["w_img"], kp["w_txt"], kp["w2"], kp["w3"], kp["bias"])

    flops = 2 * B * (IMAGE_FEAT * (I + F) + TEXT_FEAT * (T + F)
                     + F * F + T * T + I * I + (F + T + I) * LOGITS_PAD)
    bytes_in = sum(int(a.size) * a.dtype.itemsize for a in args)
    bytes_out = B * (T + I + LOGITS_PAD) * 4
    cost = pl.CostEstimate(flops=flops, transcendentals=0,
                           bytes_accessed=int(bytes_in + bytes_out))

    vmem = pl.BlockSpec(memory_space=pltpu.MemorySpace.VMEM)
    # Single no-grid launch: all weights (~1.6 MB bf16) + activations are
    # full-extent VMEM blocks; well under scoped VMEM on v5e/v6e/v7x.
    text_h, image_h, logits = pl.pallas_call(
        kernel,
        out_shape=(
            jax.ShapeDtypeStruct((B, T), f32),
            jax.ShapeDtypeStruct((B, I), f32),
            jax.ShapeDtypeStruct((B, LOGITS_PAD), f32),
        ),
        in_specs=[vmem] * len(args),
        out_specs=(vmem, vmem, vmem),
        cost_estimate=cost,
    )(*args)

    return {
        "fusion_output": logits[:, 0:OUT_DIM],
        "image_output": logits[:, 2 * OUT_DIM:3 * OUT_DIM],
        "text_output": logits[:, OUT_DIM:2 * OUT_DIM],
        "text_state": text_h,
        "image_state": image_h,
    }


# ----------------------------- parameter setup -----------------------------

def init_linear(key, in_dim, out_dim, scale=0.02):
    kw, kb = jax.random.split(key)
    w = scale * jax.random.normal(kw, (in_dim, out_dim), dtype=jnp.float32)
    b = scale * jax.random.normal(kb, (1, out_dim), dtype=jnp.float32)
    return w, b


def make_params(key, fusion_dim, text_dim, image_dim):
    """Returns (packed kernel params, unpacked f32/bf16 reference params)."""
    F, T, I = fusion_dim, text_dim, image_dim
    keys = jax.random.split(key, 9)
    bf16 = jnp.bfloat16

    fw1, fb1 = init_linear(keys[0], IMAGE_FEAT + TEXT_FEAT, F)
    fw2, fb2 = init_linear(keys[1], F, F)
    fw3, fb3 = init_linear(keys[2], F, OUT_DIM)
    tw1, tb1 = init_linear(keys[3], TEXT_FEAT, T)
    tw2, tb2 = init_linear(keys[4], T, T)
    tw3, tb3 = init_linear(keys[5], T, OUT_DIM)
    iw1, ib1 = init_linear(keys[6], IMAGE_FEAT, I)
    iw2, ib2 = init_linear(keys[7], I, I)
    iw3, ib3 = init_linear(keys[8], I, OUT_DIM)

    # -- layer-1: module concatenates (image, text), so fw1 rows split that way.
    w_img = jnp.concatenate([iw1, fw1[:IMAGE_FEAT]], axis=1).astype(bf16)  # (2048, I+F)
    w_txt = jnp.concatenate([tw1, fw1[IMAGE_FEAT:]], axis=1).astype(bf16)  # (768,  T+F)

    # -- layer-2: three W2s packed along lanes into one slab.
    H = max(F, T, I)
    w2 = jnp.zeros((H, F + T + I), jnp.float32)
    w2 = w2.at[:F, 0:F].set(fw2)
    w2 = w2.at[:T, F:F + T].set(tw2)
    w2 = w2.at[:I, F + T:].set(iw2)
    w2 = w2.astype(bf16)

    # -- layer-3: ONE combined head; fusion lanes 0:3, text 3:6, image 6:9.
    w3 = jnp.zeros((F + T + I, LOGITS_PAD), jnp.float32)
    w3 = w3.at[0:F, 0:OUT_DIM].set(fw3)
    w3 = w3.at[F:F + T, OUT_DIM:2 * OUT_DIM].set(tw3)
    w3 = w3.at[F + T:, 2 * OUT_DIM:HEAD_W].set(iw3)
    w3 = w3.astype(bf16)

    # -- all 9 biases packed into one f32 slab (rows indexed in-kernel).
    WB = max(F + T + I, LOGITS_PAD)
    bias = jnp.zeros((4, WB), jnp.float32)
    bias = bias.at[0, 0:I].set(ib1[0])
    bias = bias.at[0, I:I + F].set(fb1[0])        # fusion b1 added once (via row 0)
    bias = bias.at[1, 0:T].set(tb1[0])
    bias = bias.at[2, 0:F].set(fb2[0])
    bias = bias.at[2, F:F + T].set(tb2[0])
    bias = bias.at[2, F + T:F + T + I].set(ib2[0])
    bias = bias.at[3, 0:HEAD_W].set(jnp.concatenate([fb3, tb3, ib3], axis=1)[0])

    kernel_params = dict(w_img=w_img, w_txt=w_txt, w2=w2, w3=w3, bias=bias)
    ref_params = dict(
        fw1=fw1.astype(bf16), fb1=fb1, fw2=fw2.astype(bf16), fb2=fb2,
        fw3=fw3.astype(bf16), fb3=fb3,
        tw1=tw1.astype(bf16), tb1=tb1, tw2=tw2.astype(bf16), tb2=tb2,
        tw3=tw3.astype(bf16), tb3=tb3,
        iw1=iw1.astype(bf16), ib1=ib1, iw2=iw2.astype(bf16), ib2=ib2,
        iw3=iw3.astype(bf16), ib3=ib3)
    return kernel_params, ref_params


# --------------------------------- self-test --------------------------------

def _bf(x):
    """Mirror the kernel's bf16 rounding of matmul LHS operands."""
    return x.astype(jnp.bfloat16).astype(jnp.float32)


def ref_forward(img, txt, r):
    """Pure-JAX reference mirroring the kernel's bf16-weight math."""
    f32 = jnp.float32
    img_b, txt_b = _bf(img), _bf(txt)

    f_h1 = jnp.maximum(img_b @ r["fw1"][:IMAGE_FEAT].astype(f32)
                       + txt_b @ r["fw1"][IMAGE_FEAT:].astype(f32) + r["fb1"], 0.0)
    t_h1 = jnp.maximum(txt_b @ r["tw1"].astype(f32) + r["tb1"], 0.0)
    i_h1 = jnp.maximum(img_b @ r["iw1"].astype(f32) + r["ib1"], 0.0)

    f_h2 = jnp.maximum(_bf(f_h1) @ r["fw2"].astype(f32) + r["fb2"], 0.0)
    t_h2 = jnp.maximum(_bf(t_h1) @ r["tw2"].astype(f32) + r["tb2"], 0.0)
    i_h2 = jnp.maximum(_bf(i_h1) @ r["iw2"].astype(f32) + r["ib2"], 0.0)

    return {
        "fusion_output": _bf(f_h2) @ r["fw3"].astype(f32) + r["fb3"],
        "text_output": _bf(t_h2) @ r["tw3"].astype(f32) + r["tb3"],
        "image_output": _bf(i_h2) @ r["iw3"].astype(f32) + r["ib3"],
        "text_state": t_h1,
        "image_state": i_h1,
    }


if __name__ == "__main__":
    B = 2
    FUSION_DIM = 128   # args.fusion_dim
    TEXT_DIM = 128     # args.text_dim
    IMAGE_DIM = 128    # args.image_dim

    key = jax.random.PRNGKey(0)
    k_img, k_txt, k_params = jax.random.split(key, 3)

    # TODO(synk): pretrained BERT / ResNet-152 backbones are not re-implemented;
    # their pooled outputs are synthesized as kernel inputs here.
    image_hidden_state = jax.random.normal(k_img, (B, IMAGE_FEAT), jnp.float32)
    text_hidden_state = jax.random.normal(k_txt, (B, TEXT_FEAT), jnp.float32)

    kernel_params, ref_params = make_params(k_params, FUSION_DIM, TEXT_DIM, IMAGE_DIM)

    res = jax.jit(self_mm_forward)(image_hidden_state, text_hidden_state, kernel_params)
    res = jax.block_until_ready(res)

    ref = ref_forward(image_hidden_state, text_hidden_state, ref_params)

    for name in ("fusion_output", "text_output", "image_output",
                 "text_state", "image_state"):
        assert jnp.allclose(res[name], ref[name], atol=1e-3, rtol=1e-3), name

    print("KERNEL_OK")
</pallas_src>

<mosaic_0001>
module attributes {stable_mosaic.version = 11 : i64} {
  func.func @kernel(%arg0: memref<2x2048xbf16, #tpu.memory_space<vmem>>, %arg1: memref<2x768xbf16, #tpu.memory_space<vmem>>, %arg2: memref<2048x256xbf16, #tpu.memory_space<vmem>>, %arg3: memref<768x256xbf16, #tpu.memory_space<vmem>>, %arg4: memref<128x384xbf16, #tpu.memory_space<vmem>>, %arg5: memref<384x128xbf16, #tpu.memory_space<vmem>>, %arg6: memref<4x384xf32, #tpu.memory_space<vmem>>, %arg7: memref<2x128xf32, #tpu.memory_space<vmem>>, %arg8: memref<2x128xf32, #tpu.memory_space<vmem>>, %arg9: memref<2x128xf32, #tpu.memory_space<vmem>>) attributes {dimension_semantics = [], scalar_prefetch = 0 : i64, scratch_operands = 0 : i64, tpu.core_type = #tpu.core_type<tc>} {
    %c0 = arith.constant 0 : index
    %c0_0 = arith.constant 0 : index
    %0 = vector.load %arg0[%c0, %c0_0] : memref<2x2048xbf16, #tpu.memory_space<vmem>>, vector<2x2048xbf16>
    %c0_1 = arith.constant 0 : index
    %c0_2 = arith.constant 0 : index
    %1 = vector.load %arg1[%c0_1, %c0_2] : memref<2x768xbf16, #tpu.memory_space<vmem>>, vector<2x768xbf16>
    %c0_3 = arith.constant 0 : index
    %c0_4 = arith.constant 0 : index
    %2 = vector.load %arg2[%c0_3, %c0_4] : memref<2048x256xbf16, #tpu.memory_space<vmem>>, vector<2048x256xbf16>
    %cst = arith.constant dense<0.000000e+00> : vector<2x256xf32>
    %3 = tpu.matmul %0, %2, %cst {dimension_numbers = #tpu.dot_dimension_numbers<[1], [0], [0], [1], [0, 0, 1, 1], [], []>} : vector<2x2048xbf16>, vector<2048x256xbf16>, vector<2x256xf32> -> vector<2x256xf32>
    %c0_5 = arith.constant 0 : index
    %c0_6 = arith.constant 0 : index
    %4 = vector.load %arg6[%c0_5, %c0_6] : memref<4x384xf32, #tpu.memory_space<vmem>>, vector<1x256xf32>
    %5 = vector.broadcast %4 : vector<1x256xf32> to vector<2x256xf32>
    %6 = arith.addf %3, %5 : vector<2x256xf32>
    %c0_7 = arith.constant 0 : index
    %c0_8 = arith.constant 0 : index
    %7 = vector.load %arg3[%c0_7, %c0_8] : memref<768x256xbf16, #tpu.memory_space<vmem>>, vector<768x256xbf16>
    %cst_9 = arith.constant dense<0.000000e+00> : vector<2x256xf32>
    %8 = tpu.matmul %1, %7, %cst_9 {dimension_numbers = #tpu.dot_dimension_numbers<[1], [0], [0], [1], [0, 0, 1, 1], [], []>} : vector<2x768xbf16>, vector<768x256xbf16>, vector<2x256xf32> -> vector<2x256xf32>
    %c1 = arith.constant 1 : index
    %c0_10 = arith.constant 0 : index
    %9 = vector.load %arg6[%c1, %c0_10] : memref<4x384xf32, #tpu.memory_space<vmem>>, vector<1x256xf32>
    %10 = vector.broadcast %9 : vector<1x256xf32> to vector<2x256xf32>
    %11 = arith.addf %8, %10 : vector<2x256xf32>
    %12 = vector.extract_strided_slice %6 {offsets = [0, 0], sizes = [2, 128], strides = [1, 1]} : vector<2x256xf32> to vector<2x128xf32>
    %cst_11 = arith.constant 0.000000e+00 : f32
    %13 = vector.broadcast %cst_11 : f32 to vector<2x128xf32>
    %14 = arith.maximumf %12, %13 : vector<2x128xf32>
    %15 = vector.extract_strided_slice %11 {offsets = [0, 0], sizes = [2, 128], strides = [1, 1]} : vector<2x256xf32> to vector<2x128xf32>
    %cst_12 = arith.constant 0.000000e+00 : f32
    %16 = vector.broadcast %cst_12 : f32 to vector<2x128xf32>
    %17 = arith.maximumf %15, %16 : vector<2x128xf32>
    %18 = vector.extract_strided_slice %6 {offsets = [0, 128], sizes = [2, 128], strides = [1, 1]} : vector<2x256xf32> to vector<2x128xf32>
    %19 = vector.extract_strided_slice %11 {offsets = [0, 128], sizes = [2, 128], strides = [1, 1]} : vector<2x256xf32> to vector<2x128xf32>
    %20 = arith.addf %18, %19 : vector<2x128xf32>
    %cst_13 = arith.constant 0.000000e+00 : f32
    %21 = vector.broadcast %cst_13 : f32 to vector<2x128xf32>
    %22 = arith.maximumf %20, %21 : vector<2x128xf32>
    %c0_14 = arith.constant 0 : index
    %c0_15 = arith.constant 0 : index
    %23 = vector.load %arg8[%c0_14, %c0_15] : memref<2x128xf32, #tpu.memory_space<vmem>>, vector<2x128xf32>
    tpu.vector_store %arg8[%c0_14, %c0_15], %14 {strides = array<i32>} : memref<2x128xf32, #tpu.memory_space<vmem>>, vector<2x128xf32>,
    %c0_16 = arith.constant 0 : index
    %c0_17 = arith.constant 0 : index
    %24 = vector.load %arg7[%c0_16, %c0_17] : memref<2x128xf32, #tpu.memory_space<vmem>>, vector<2x128xf32>
    tpu.vector_store %arg7[%c0_16, %c0_17], %17 {strides = array<i32>} : memref<2x128xf32, #tpu.memory_space<vmem>>, vector<2x128xf32>,
    %25 = arith.truncf %22 : vector<2x128xf32> to vector<2x128xbf16>
    %c0_18 = arith.constant 0 : index
    %c0_19 = arith.constant 0 : index
    %26 = vector.load %arg4[%c0_18, %c0_19] : memref<128x384xbf16, #tpu.memory_space<vmem>>, vector<128x128xbf16>
    %cst_20 = arith.constant dense<0.000000e+00> : vector<2x128xf32>
    %27 = tpu.matmul %25, %26, %cst_20 {dimension_numbers = #tpu.dot_dimension_numbers<[1], [0], [0], [1], [0, 0, 1, 1], [], []>} : vector<2x128xbf16>, vector<128x128xbf16>, vector<2x128xf32> -> vector<2x128xf32>
    %28 = arith.truncf %17 : vector<2x128xf32> to vector<2x128xbf16>
    %c0_21 = arith.constant 0 : index
    %c128 = arith.constant 128 : index
    %29 = vector.load %arg4[%c0_21, %c128] : memref<128x384xbf16, #tpu.memory_space<vmem>>, vector<128x128xbf16>
    %cst_22 = arith.constant dense<0.000000e+00> : vector<2x128xf32>
    %30 = tpu.matmul %28, %29, %cst_22 {dimension_numbers = #tpu.dot_dimension_numbers<[1], [0], [0], [1], [0, 0, 1, 1], [], []>} : vector<2x128xbf16>, vector<128x128xbf16>, vector<2x128xf32> -> vector<2x128xf32>
    %31 = arith.truncf %14 : vector<2x128xf32> to vector<2x128xbf16>
    %c0_23 = arith.constant 0 : index
    %c256 = arith.constant 256 : index
    %32 = vector.load %arg4[%c0_23, %c256] : memref<128x384xbf16, #tpu.memory_space<vmem>>, vector<128x128xbf16>
    %cst_24 = arith.constant dense<0.000000e+00> : vector<2x128xf32>
    %33 = tpu.matmul %31, %32, %cst_24 {dimension_numbers = #tpu.dot_dimension_numbers<[1], [0], [0], [1], [0, 0, 1, 1], [], []>} : vector<2x128xbf16>, vector<128x128xbf16>, vector<2x128xf32> -> vector<2x128xf32>
    %34 = tpu.concatenate %27, %30, %33 in 1 : vector<2x128xf32>, vector<2x128xf32>, vector<2x128xf32> -> vector<2x384xf32>
    %c2 = arith.constant 2 : index
    %c0_25 = arith.constant 0 : index
    %35 = vector.load %arg6[%c2, %c0_25] : memref<4x384xf32, #tpu.memory_space<vmem>>, vector<1x384xf32>
    %36 = vector.broadcast %35 : vector<1x384xf32> to vector<2x384xf32>
    %37 = arith.addf %34, %36 : vector<2x384xf32>
    %cst_26 = arith.constant 0.000000e+00 : f32
    %38 = vector.broadcast %cst_26 : f32 to vector<2x384xf32>
    %39 = arith.maximumf %37, %38 : vector<2x384xf32>
    %40 = arith.truncf %39 : vector<2x384xf32> to vector<2x384xbf16>
    %c0_27 = arith.constant 0 : index
    %c0_28 = arith.constant 0 : index
    %41 = vector.load %arg5[%c0_27, %c0_28] : memref<384x128xbf16, #tpu.memory_space<vmem>>, vector<384x128xbf16>
    %cst_29 = arith.constant dense<0.000000e+00> : vector<2x128xf32>
    %42 = tpu.matmul %40, %41, %cst_29 {dimension_numbers = #tpu.dot_dimension_numbers<[1], [0], [0], [1], [0, 0, 1, 1], [], []>} : vector<2x384xbf16>, vector<384x128xbf16>, vector<2x128xf32> -> vector<2x128xf32>
    %c3 = arith.constant 3 : index
    %c0_30 = arith.constant 0 : index
    %43 = vector.load %arg6[%c3, %c0_30] : memref<4x384xf32, #tpu.memory_space<vmem>>, vector<1x128xf32>
    %44 = vector.broadcast %43 : vector<1x128xf32> to vector<2x128xf32>
    %45 = arith.addf %42, %44 : vector<2x128xf32>
    %c0_31 = arith.constant 0 : index
    %c0_32 = arith.constant 0 : index
    %46 = vector.load %arg9[%c0_31, %c0_32] : memref<2x128xf32, #tpu.memory_space<vmem>>, vector<2x128xf32>
    tpu.vector_store %arg9[%c0_31, %c0_32], %45 {strides = array<i32>} : memref<2x128xf32, #tpu.memory_space<vmem>>, vector<2x128xf32>,
    return
  }
}

</mosaic_0001>

<llo_original>
// kernel: self_mm_forward.1
$region0: #{self_mm_forward.1}
  #allocation0 [shape = 'u32[]', space=smem, size = 0x4, offset = 0x4, fixed_abs, tag = 'smem constant byte address 0x4 - core index']
  #allocation1 [shape = 'u32[144,128]{1,0:T(1,128)}', space=vmem, size = 0x12000, scoped, tag = 'internal scratch']
  %s0 = inlined_call_operand.vmem [shape: bf16[2,2048], index: 0, kind: input, shape index: {}]
  %s1 = inlined_call_operand.vmem [shape: bf16[2,768], index: 1, kind: input, shape index: {}]
  %s2 = inlined_call_operand.hbm [shape: bf16[2048,256], index: 2, kind: input, shape index: {}]
  %s3 = inlined_call_operand.hbm [shape: bf16[768,256], index: 3, kind: input, shape index: {}]
  %s4 = inlined_call_operand.hbm [shape: bf16[128,384], index: 4, kind: input, shape index: {}]
  %s5 = inlined_call_operand.hbm [shape: bf16[384,128], index: 5, kind: input, shape index: {}]
  %s6 = inlined_call_operand.vmem [shape: f32[4,384], index: 6, kind: input, shape index: {}]
  %s7 = inlined_call_operand.hbm [shape: f32[2,128], index: 7, kind: output, shape index: {0}]
  %s8 = inlined_call_operand.hbm [shape: f32[2,128], index: 8, kind: output, shape index: {1}]
  %s9 = inlined_call_operand.vmem [shape: f32[2,128], index: 9, kind: output, shape index: {2}]
  %10 = xla_tuple %s7, %s8, %s9
  %s11 = sld [smem:[#allocation0]]
  $region70: #{self_mm_forward.1} parent=0
    _
  %s13 = ssub.s32 1, %s11
  %s14 = scalar_select 0, %s13, %s11
  $region1: #{self_mm_forward.1} parent=0
    #allocation2 [shape = 'u8[1048576]{0}', space=vmem, size = 0x100000, scoped, tag = 'input window, operand 2, single buffered']
    #allocation3 [shape = 's32[1]{0}', space=sflag, size = 0x4, scoped, tag = 'scoped memory for self_mm_forward.1']
    #allocation4 [shape = 's32[1]{0}', space=sflag, size = 0x4, scoped, tag = 'scoped memory for self_mm_forward.1']
    #allocation5 [shape = 'u8[393216]{0}', space=vmem, size = 0x60000, scoped, tag = 'input window, operand 3, single buffered']
    #allocation6 [shape = 's32[1]{0}', space=sflag, size = 0x4, scoped, tag = 'scoped memory for self_mm_forward.1']
    #allocation7 [shape = 'u8[98304]{0}', space=vmem, size = 0x18000, scoped, tag = 'input window, operand 4, single buffered']
    #allocation8 [shape = 'u8[98304]{0}', space=vmem, size = 0x18000, scoped, tag = 'input window, operand 5, single buffered']
    #allocation9 [shape = 's32[1]{0}', space=sflag, size = 0x4, scoped, tag = 'scoped memory for self_mm_forward.1']
    #allocation10 [shape = 'u8[1024]{0}', space=vmem, size = 0x400, scoped, tag = 'output window, operand 0, single buffered']
    #allocation11 [shape = 'u8[1024]{0}', space=vmem, size = 0x400, scoped, tag = 'output window, operand 1, single buffered']
    #allocation12 [shape = 's32[1]{0}', space=sflag, size = 0x4, scoped, tag = 'scoped memory for self_mm_forward.1']
    %15 = vsyncpa [#allocation3], 0
    %16 = vsyncpa [#allocation6], 0
    %17 = vsyncpa [#allocation9], 0
    %18 = vsyncpa [#allocation4], 0
    %19 = vsyncpa [#allocation12], 0
    // Predicated region
    $region2: #{self_mm_forward.1} parent=1 // pred_check
      _
    $region3: #{self_mm_forward.1} parent=1 // pred_check_branch
      %21 = sbr.rel (0) target = $region5
    $region4: #{self_mm_forward.1} parent=1 // pred_region
      _
    $region5: #{self_mm_forward.1} parent=1 // pred_fallthru
      _
    // Predicated region
    $region6: #{self_mm_forward.1} parent=1 // pred_check
      _
    $region7: #{self_mm_forward.1} parent=1 // pred_check_branch
      %23 = sbr.rel (0) target = $region9
    $region8: #{self_mm_forward.1} parent=1 // pred_region
      _
    $region9: #{self_mm_forward.1} parent=1 // pred_fallthru
      _
    // Predicated region
    $region10: #{self_mm_forward.1} parent=1 // pred_check
      _
    $region11: #{self_mm_forward.1} parent=1 // pred_check_branch
      %25 = sbr.rel (0) target = $region13
    $region12: #{self_mm_forward.1} parent=1 // pred_region
      %s27 = ssub.s32 32768, 32768
      %28 = vsyncadd [#allocation3], %s27
      %s29 = sshll.u32 [#allocation2], 4
      %s30 = int_to_ptr.vmem [resolvable:$true] %s29
      %35 = dma.hbm_to_vmem [thread:$0]  %s2, 32768, %s30, [#allocation3], 128, 128, 8
    $region13: #{self_mm_forward.1} parent=1 // pred_fallthru
      _
    // Predicated region
    $region14: #{self_mm_forward.1} parent=1 // pred_check
      _
    $region15: #{self_mm_forward.1} parent=1 // pred_check_branch
      %37 = sbr.rel (0) target = $region17
    $region16: #{self_mm_forward.1} parent=1 // pred_region
      %s39 = ssub.s32 12288, 12288
      %40 = vsyncadd [#allocation6], %s39
      %s41 = sshll.u32 [#allocation5], 4
      %s42 = int_to_ptr.vmem [resolvable:$true] %s41
      %47 = dma.hbm_to_vmem [thread:$0]  %s3, 12288, %s42, [#allocation6], 128, 128, 8
    $region17: #{self_mm_forward.1} parent=1 // pred_fallthru
      _
    // Predicated region
    $region18: #{self_mm_forward.1} parent=1 // pred_check
      _
    $region19: #{self_mm_forward.1} parent=1 // pred_check_branch
      %49 = sbr.rel (0) target = $region21
    $region20: #{self_mm_forward.1} parent=1 // pred_region
      %s51 = ssub.s32 3072, 3072
      %52 = vsyncadd [#allocation6], %s51
      %s53 = sshll.u32 [#allocation7], 4
      %s54 = int_to_ptr.vmem [resolvable:$true] %s53
      %59 = dma.hbm_to_vmem [thread:$0]  %s4, 3072, %s54, [#allocation6], 192, 192, 12
    $region21: #{self_mm_forward.1} parent=1 // pred_fallthru
      _
    // Predicated region
    $region22: #{self_mm_forward.1} parent=1 // pred_check
      _
    $region23: #{self_mm_forward.1} parent=1 // pred_check_branch
      %61 = sbr.rel (0) target = $region25
    $region24: #{self_mm_forward.1} parent=1 // pred_region
      %s63 = ssub.s32 3072, 3072
      %64 = vsyncadd [#allocation9], %s63
      %s65 = sshll.u32 [#allocation8], 4
      %s66 = int_to_ptr.vmem [resolvable:$true] %s65
      %71 = dma.hbm_to_vmem [thread:$0]  %s5, 3072, %s66, [#allocation9], 64, 64, 4
    $region25: #{self_mm_forward.1} parent=1 // pred_fallthru
      _
    // Predicated region
    $region26: #{self_mm_forward.1} parent=1 // pred_check
      _
    $region27: #{self_mm_forward.1} parent=1 // pred_check_branch
      %73 = sbr.rel (0) target = $region29
    $region28: #{self_mm_forward.1} parent=1 // pred_region
      _
    $region29: #{self_mm_forward.1} parent=1 // pred_fallthru
      _
    // Predicated region
    $region30: #{self_mm_forward.1} parent=1 // pred_check
      _
    $region31: #{self_mm_forward.1} parent=1 // pred_check_branch
      %75 = sbr.rel (0) target = $region33
    $region32: #{self_mm_forward.1} parent=1 // pred_region
      %76 = dma.done [#allocation3], 32768
    $region33: #{self_mm_forward.1} parent=1 // pred_fallthru
      _
    // Predicated region
    $region34: #{self_mm_forward.1} parent=1 // pred_check
      _
    $region35: #{self_mm_forward.1} parent=1 // pred_check_branch
      %78 = sbr.rel (0) target = $region37
    $region36: #{self_mm_forward.1} parent=1 // pred_region
      %79 = dma.done [#allocation6], 12288
    $region37: #{self_mm_forward.1} parent=1 // pred_fallthru
      _
    // Predicated region
    $region38: #{self_mm_forward.1} parent=1 // pred_check
      _
    $region39: #{self_mm_forward.1} parent=1 // pred_check_branch
      %81 = sbr.rel (0) target = $region41
    $region40: #{self_mm_forward.1} parent=1 // pred_region
      %82 = dma.done [#allocation6], 3072
    $region41: #{self_mm_forward.1} parent=1 // pred_fallthru
      _
    // Predicated region
    $region42: #{self_mm_forward.1} parent=1 // pred_check
      _
    $region43: #{self_mm_forward.1} parent=1 // pred_check_branch
      %84 = sbr.rel (0) target = $region45
    $region44: #{self_mm_forward.1} parent=1 // pred_region
      %85 = dma.done [#allocation9], 3072
    $region45: #{self_mm_forward.1} parent=1 // pred_fallthru
      _
    %v87 = vld [vmem:[%s0] sm:$0xff]
    %v88 = vld [vmem:[%s0 + $0x8] sm:$0xff]
    %v89 = vld [vmem:[%s1] sm:$0x3f]
    %v90 = vld [vmem:[#allocation2] sm:$0xff]
    %v91 = vld [vmem:[#allocation2 + $0x8] sm:$0xff]
    %v92 = vld [vmem:[#allocation2 + $0x10] sm:$0xff]
    %v93 = vld [vmem:[#allocation2 + $0x18] sm:$0xff]
    %v94 = vld [vmem:[#allocation2 + $0x20] sm:$0xff]
    %v95 = vld [vmem:[#allocation2 + $0x28] sm:$0xff]
    %v96 = vld [vmem:[#allocation2 + $0x30] sm:$0xff]
    %v97 = vld [vmem:[#allocation2 + $0x38] sm:$0xff]
    %v98 = vld [vmem:[#allocation2 + $0x40] sm:$0xff]
    %v99 = vld [vmem:[#allocation2 + $0x48] sm:$0xff]
    %v100 = vld [vmem:[#allocation2 + $0x50] sm:$0xff]
    %v101 = vld [vmem:[#allocation2 + $0x58] sm:$0xff]
    %v102 = vld [vmem:[#allocation2 + $0x60] sm:$0xff]
    %v103 = vld [vmem:[#allocation2 + $0x68] sm:$0xff]
    %v104 = vld [vmem:[#allocation2 + $0x70] sm:$0xff]
    %v105 = vld [vmem:[#allocation2 + $0x78] sm:$0xff]
    %v106 = vld [vmem:[#allocation2 + $0x80] sm:$0xff]
    %v107 = vld [vmem:[#allocation2 + $0x88] sm:$0xff]
    %v108 = vld [vmem:[#allocation2 + $0x90] sm:$0xff]
    %v109 = vld [vmem:[#allocation2 + $0x98] sm:$0xff]
    %v110 = vld [vmem:[#allocation2 + $0xa0] sm:$0xff]
    %v111 = vld [vmem:[#allocation2 + $0xa8] sm:$0xff]
    %v112 = vld [vmem:[#allocation2 + $0xb0] sm:$0xff]
    %v113 = vld [vmem:[#allocation2 + $0xb8] sm:$0xff]
    %v114 = vld [vmem:[#allocation2 + $0xc0] sm:$0xff]
    %v115 = vld [vmem:[#allocation2 + $0xc8] sm:$0xff]
    %v116 = vld [vmem:[#allocation2 + $0xd0] sm:$0xff]
    %v117 = vld [vmem:[#allocation2 + $0xd8] sm:$0xff]
    %v118 = vld [vmem:[#allocation2 + $0xe0] sm:$0xff]
    %v119 = vld [vmem:[#allocation2 + $0xe8] sm:$0xff]
    %v120 = vld [vmem:[#allocation2 + $0xf0] sm:$0xff]
    %v121 = vld [vmem:[#allocation2 + $0xf8] sm:$0xff]
    %v122 = vld [vmem:[#allocation2 + $0x100] sm:$0xff]
    %v123 = vld [vmem:[#allocation2 + $0x108] sm:$0xff]
    %v124 = vld [vmem:[#allocation2 + $0x110] sm:$0xff]
    %v125 = vld [vmem:[#allocation2 + $0x118] sm:$0xff]
    %v126 = vld [vmem:[#allocation2 + $0x120] sm:$0xff]
    %v127 = vld [vmem:[#allocation2 + $0x128] sm:$0xff]
    %v128 = vld [vmem:[#allocation2 + $0x130] sm:$0xff]
    %v129 = vld [vmem:[#allocation2 + $0x138] sm:$0xff]
    %v130 = vld [vmem:[#allocation2 + $0x140] sm:$0xff]
    %v131 = vld [vmem:[#allocation2 + $0x148] sm:$0xff]
    %v132 = vld [vmem:[#allocation2 + $0x150] sm:$0xff]
    %v133 = vld [vmem:[#allocation2 + $0x158] sm:$0xff]
    %v134 = vld [vmem:[#allocation2 + $0x160] sm:$0xff]
    %v135 = vld [vmem:[#allocation2 + $0x168] sm:$0xff]
    %v136 = vld [vmem:[#allocation2 + $0x170] sm:$0xff]
    %v137 = vld [vmem:[#allocation2 + $0x178] sm:$0xff]
    %v138 = vld [vmem:[#allocation2 + $0x180] sm:$0xff]
    %v139 = vld [vmem:[#allocation2 + $0x188] sm:$0xff]
    %v140 = vld [vmem:[#allocation2 + $0x190] sm:$0xff]
    %v141 = vld [vmem:[#allocation2 + $0x198] sm:$0xff]
    %v142 = vld [vmem:[#allocation2 + $0x1a0] sm:$0xff]
    %v143 = vld [vmem:[#allocation2 + $0x1a8] sm:$0xff]
    %v144 = vld [vmem:[#allocation2 + $0x1b0] sm:$0xff]
    %v145 = vld [vmem:[#allocation2 + $0x1b8] sm:$0xff]
    %v146 = vld [vmem:[#allocation2 + $0x1c0] sm:$0xff]
    %v147 = vld [vmem:[#allocation2 + $0x1c8] sm:$0xff]
    %v148 = vld [vmem:[#allocation2 + $0x1d0] sm:$0xff]
    %v149 = vld [vmem:[#allocation2 + $0x1d8] sm:$0xff]
    %v150 = vld [vmem:[#allocation2 + $0x1e0] sm:$0xff]
    %v151 = vld [vmem:[#allocation2 + $0x1e8] sm:$0xff]
    %v152 = vld [vmem:[#allocation2 + $0x1f0] sm:$0xff]
    %v153 = vld [vmem:[#allocation2 + $0x1f8] sm:$0xff]
    %v154 = vld [vmem:[#allocation2 + $0x200] sm:$0xff]
    %v155 = vld [vmem:[#allocation2 + $0x208] sm:$0xff]
    %v156 = vld [vmem:[#allocation2 + $0x210] sm:$0xff]
    %v157 = vld [vmem:[#allocation2 + $0x218] sm:$0xff]
    %v158 = vld [vmem:[#allocation2 + $0x220] sm:$0xff]
    %v159 = vld [vmem:[#allocation2 + $0x228] sm:$0xff]
    %v160 = vld [vmem:[#allocation2 + $0x230] sm:$0xff]
    %v161 = vld [vmem:[#allocation2 + $0x238] sm:$0xff]
    %v162 = vld [vmem:[#allocation2 + $0x240] sm:$0xff]
    %v163 = vld [vmem:[#allocation2 + $0x248] sm:$0xff]
    %v164 = vld [vmem:[#allocation2 + $0x250] sm:$0xff]
    %v165 = vld [vmem:[#allocation2 + $0x258] sm:$0xff]
    %v166 = vld [vmem:[#allocation2 + $0x260] sm:$0xff]
    %v167 = vld [vmem:[#allocation2 + $0x268] sm:$0xff]
    %v168 = vld [vmem:[#allocation2 + $0x270] sm:$0xff]
    %v169 = vld [vmem:[#allocation2 + $0x278] sm:$0xff]
    %v170 = vld [vmem:[#allocation2 + $0x280] sm:$0xff]
    %v171 = vld [vmem:[#allocation2 + $0x288] sm:$0xff]
    %v172 = vld [vmem:[#allocation2 + $0x290] sm:$0xff]
    %v173 = vld [vmem:[#allocation2 + $0x298] sm:$0xff]
    %v174 = vld [vmem:[#allocation2 + $0x2a0] sm:$0xff]
    %v175 = vld [vmem:[#allocation2 + $0x2a8] sm:$0xff]
    %v176 = vld [vmem:[#allocation2 + $0x2b0] sm:$0xff]
    %v177 = vld [vmem:[#allocation2 + $0x2b8] sm:$0xff]
    %v178 = vld [vmem:[#allocation2 + $0x2c0] sm:$0xff]
    %v179 = vld [vmem:[#allocation2 + $0x2c8] sm:$0xff]
    %v180 = vld [vmem:[#allocation2 + $0x2d0] sm:$0xff]
    %v181 = vld [vmem:[#allocation2 + $0x2d8] sm:$0xff]
    %v182 = vld [vmem:[#allocation2 + $0x2e0] sm:$0xff]
    %v183 = vld [vmem:[#allocation2 + $0x2e8] sm:$0xff]
    %v184 = vld [vmem:[#allocation2 + $0x2f0] sm:$0xff]
    %v185 = vld [vmem:[#allocation2 + $0x2f8] sm:$0xff]
    %v186 = vld [vmem:[#allocation2 + $0x300] sm:$0xff]
    %v187 = vld [vmem:[#allocation2 + $0x308] sm:$0xff]
    %v188 = vld [vmem:[#allocation2 + $0x310] sm:$0xff]
    %v189 = vld [vmem:[#allocation2 + $0x318] sm:$0xff]
    %v190 = vld [vmem:[#allocation2 + $0x320] sm:$0xff]
    %v191 = vld [vmem:[#allocation2 + $0x328] sm:$0xff]
    %v192 = vld [vmem:[#allocation2 + $0x330] sm:$0xff]
    %v193 = vld [vmem:[#allocation2 + $0x338] sm:$0xff]
    %v194 = vld [vmem:[#allocation2 + $0x340] sm:$0xff]
    %v195 = vld [vmem:[#allocation2 + $0x348] sm:$0xff]
    %v196 = vld [vmem:[#allocation2 + $0x350] sm:$0xff]
    %v197 = vld [vmem:[#allocation2 + $0x358] sm:$0xff]
    %v198 = vld [vmem:[#allocation2 + $0x360] sm:$0xff]
    %v199 = vld [vmem:[#allocation2 + $0x368] sm:$0xff]
    %v200 = vld [vmem:[#allocation2 + $0x370] sm:$0xff]
    %v201 = vld [vmem:[#allocation2 + $0x378] sm:$0xff]
    %v202 = vld [vmem:[#allocation2 + $0x380] sm:$0xff]
    %v203 = vld [vmem:[#allocation2 + $0x388] sm:$0xff]
    %v204 = vld [vmem:[#allocation2 + $0x390] sm:$0xff]
    %v205 = vld [vmem:[#allocation2 + $0x398] sm:$0xff]
    %v206 = vld [vmem:[#allocation2 + $0x3a0] sm:$0xff]
    %v207 = vld [vmem:[#allocation2 + $0x3a8] sm:$0xff]
    %v208 = vld [vmem:[#allocation2 + $0x3b0] sm:$0xff]
    %v209 = vld [vmem:[#allocation2 + $0x3b8] sm:$0xff]
    %v210 = vld [vmem:[#allocation2 + $0x3c0] sm:$0xff]
    %v211 = vld [vmem:[#allocation2 + $0x3c8] sm:$0xff]
    %v212 = vld [vmem:[#allocation2 + $0x3d0] sm:$0xff]
    %v213 = vld [vmem:[#allocation2 + $0x3d8] sm:$0xff]
    %v214 = vld [vmem:[#allocation2 + $0x3e0] sm:$0xff]
    %v215 = vld [vmem:[#allocation2 + $0x3e8] sm:$0xff]
    %v216 = vld [vmem:[#allocation2 + $0x3f0] sm:$0xff]
    %v217 = vld [vmem:[#allocation2 + $0x3f8] sm:$0xff]
    %v218 = vld [vmem:[#allocation2 + $0x400] sm:$0xff]
    %v219 = vld [vmem:[#allocation2 + $0x408] sm:$0xff]
    %v220 = vld [vmem:[#allocation2 + $0x410] sm:$0xff]
    %v221 = vld [vmem:[#allocation2 + $0x418] sm:$0xff]
    %v222 = vld [vmem:[#allocation2 + $0x420] sm:$0xff]
    %v223 = vld [vmem:[#allocation2 + $0x428] sm:$0xff]
    %v224 = vld [vmem:[#allocation2 + $0x430] sm:$0xff]
    %v225 = vld [vmem:[#allocation2 + $0x438] sm:$0xff]
    %v226 = vld [vmem:[#allocation2 + $0x440] sm:$0xff]
    %v227 = vld [vmem:[#allocation2 + $0x448] sm:$0xff]
    %v228 = vld [vmem:[#allocation2 + $0x450] sm:$0xff]
    %v229 = vld [vmem:[#allocation2 + $0x458] sm:$0xff]
    %v230 = vld [vmem:[#allocation2 + $0x460] sm:$0xff]
    %v231 = vld [vmem:[#allocation2 + $0x468] sm:$0xff]
    %v232 = vld [vmem:[#allocation2 + $0x470] sm:$0xff]
    %v233 = vld [vmem:[#allocation2 + $0x478] sm:$0xff]
    %v234 = vld [vmem:[#allocation2 + $0x480] sm:$0xff]
    %v235 = vld [vmem:[#allocation2 + $0x488] sm:$0xff]
    %v236 = vld [vmem:[#allocation2 + $0x490] sm:$0xff]
    %v237 = vld [vmem:[#allocation2 + $0x498] sm:$0xff]
    %v238 = vld [vmem:[#allocation2 + $0x4a0] sm:$0xff]
    %v239 = vld [vmem:[#allocation2 + $0x4a8] sm:$0xff]
    %v240 = vld [vmem:[#allocation2 + $0x4b0] sm:$0xff]
    %v241 = vld [vmem:[#allocation2 + $0x4b8] sm:$0xff]
    %v242 = vld [vmem:[#allocation2 + $0x4c0] sm:$0xff]
    %v243 = vld [vmem:[#allocation2 + $0x4c8] sm:$0xff]
    %v244 = vld [vmem:[#allocation2 + $0x4d0] sm:$0xff]
    %v245 = vld [vmem:[#allocation2 + $0x4d8] sm:$0xff]
    %v246 = vld [vmem:[#allocation2 + $0x4e0] sm:$0xff]
    %v247 = vld [vmem:[#allocation2 + $0x4e8] sm:$0xff]
    %v248 = vld [vmem:[#allocation2 + $0x4f0] sm:$0xff]
    %v249 = vld [vmem:[#allocation2 + $0x4f8] sm:$0xff]
    %v250 = vld [vmem:[#allocation2 + $0x500] sm:$0xff]
    %v251 = vld [vmem:[#allocation2 + $0x508] sm:$0xff]
    %v252 = vld [vmem:[#allocation2 + $0x510] sm:$0xff]
    %v253 = vld [vmem:[#allocation2 + $0x518] sm:$0xff]
    %v254 = vld [vmem:[#allocation2 + $0x520] sm:$0xff]
    %v255 = vld [vmem:[#allocation2 + $0x528] sm:$0xff]
    %v256 = vld [vmem:[#allocation2 + $0x530] sm:$0xff]
    %v257 = vld [vmem:[#allocation2 + $0x538] sm:$0xff]
    %v258 = vld [vmem:[#allocation2 + $0x540] sm:$0xff]
    %v259 = vld [vmem:[#allocation2 + $0x548] sm:$0xff]
    %v260 = vld [vmem:[#allocation2 + $0x550] sm:$0xff]
    %v261 = vld [vmem:[#allocation2 + $0x558] sm:$0xff]
    %v262 = vld [vmem:[#allocation2 + $0x560] sm:$0xff]
    %v263 = vld [vmem:[#allocation2 + $0x568] sm:$0xff]
    %v264 = vld [vmem:[#allocation2 + $0x570] sm:$0xff]
    %v265 = vld [vmem:[#allocation2 + $0x578] sm:$0xff]
    %v266 = vld [vmem:[#allocation2 + $0x580] sm:$0xff]
    %v267 = vld [vmem:[#allocation2 + $0x588] sm:$0xff]
    %v268 = vld [vmem:[#allocation2 + $0x590] sm:$0xff]
    %v269 = vld [vmem:[#allocation2 + $0x598] sm:$0xff]
    %v270 = vld [vmem:[#allocation2 + $0x5a0] sm:$0xff]
    %v271 = vld [vmem:[#allocation2 + $0x5a8] sm:$0xff]
    %v272 = vld [vmem:[#allocation2 + $0x5b0] sm:$0xff]
    %v273 = vld [vmem:[#allocation2 + $0x5b8] sm:$0xff]
    %v274 = vld [vmem:[#allocation2 + $0x5c0] sm:$0xff]
    %v275 = vld [vmem:[#allocation2 + $0x5c8] sm:$0xff]
    %v276 = vld [vmem:[#allocation2 + $0x5d0] sm:$0xff]
    %v277 = vld [vmem:[#allocation2 + $0x5d8] sm:$0xff]
    %v278 = vld [vmem:[#allocation2 + $0x5e0] sm:$0xff]
    %v279 = vld [vmem:[#allocation2 + $0x5e8] sm:$0xff]
    %v280 = vld [vmem:[#allocation2 + $0x5f0] sm:$0xff]
    %v281 = vld [vmem:[#allocation2 + $0x5f8] sm:$0xff]
    %v282 = vld [vmem:[#allocation2 + $0x600] sm:$0xff]
    %v283 = vld [vmem:[#allocation2 + $0x608] sm:$0xff]
    %v284 = vld [vmem:[#allocation2 + $0x610] sm:$0xff]
    %v285 = vld [vmem:[#allocation2 + $0x618] sm:$0xff]
    %v286 = vld [vmem:[#allocation2 + $0x620] sm:$0xff]
    %v287 = vld [vmem:[#allocation2 + $0x628] sm:$0xff]
    %v288 = vld [vmem:[#allocation2 + $0x630] sm:$0xff]
    %v289 = vld [vmem:[#allocation2 + $0x638] sm:$0xff]
    %v290 = vld [vmem:[#allocation2 + $0x640] sm:$0xff]
    %v291 = vld [vmem:[#allocation2 + $0x648] sm:$0xff]
    %v292 = vld [vmem:[#allocation2 + $0x650] sm:$0xff]
    %v293 = vld [vmem:[#allocation2 + $0x658] sm:$0xff]
    %v294 = vld [vmem:[#allocation2 + $0x660] sm:$0xff]
    %v295 = vld [vmem:[#allocation2 + $0x668] sm:$0xff]
    %v296 = vld [vmem:[#allocation2 + $0x670] sm:$0xff]
    %v297 = vld [vmem:[#allocation2 + $0x678] sm:$0xff]
    %v298 = vld [vmem:[#allocation2 + $0x680] sm:$0xff]
    %v299 = vld [vmem:[#allocation2 + $0x688] sm:$0xff]
    %v300 = vld [vmem:[#allocation2 + $0x690] sm:$0xff]
    %v301 = vld [vmem:[#allocation2 + $0x698] sm:$0xff]
    %v302 = vld [vmem:[#allocation2 + $0x6a0] sm:$0xff]
    %v303 = vld [vmem:[#allocation2 + $0x6a8] sm:$0xff]
    %v304 = vld [vmem:[#allocation2 + $0x6b0] sm:$0xff]
    %v305 = vld [vmem:[#allocation2 + $0x6b8] sm:$0xff]
    %v306 = vld [vmem:[#allocation2 + $0x6c0] sm:$0xff]
    %v307 = vld [vmem:[#allocation2 + $0x6c8] sm:$0xff]
    %v308 = vld [vmem:[#allocation2 + $0x6d0] sm:$0xff]
    %v309 = vld [vmem:[#allocation2 + $0x6d8] sm:$0xff]
    %v310 = vld [vmem:[#allocation2 + $0x6e0] sm:$0xff]
    %v311 = vld [vmem:[#allocation2 + $0x6e8] sm:$0xff]
    %v312 = vld [vmem:[#allocation2 + $0x6f0] sm:$0xff]
    %v313 = vld [vmem:[#allocation2 + $0x6f8] sm:$0xff]
    %v314 = vld [vmem:[#allocation2 + $0x700] sm:$0xff]
    %v315 = vld [vmem:[#allocation2 + $0x708] sm:$0xff]
    %v316 = vld [vmem:[#allocation2 + $0x710] sm:$0xff]
    %v317 = vld [vmem:[#allocation2 + $0x718] sm:$0xff]
    %v318 = vld [vmem:[#allocation2 + $0x720] sm:$0xff]
    %v319 = vld [vmem:[#allocation2 + $0x728] sm:$0xff]
    %v320 = vld [vmem:[#allocation2 + $0x730] sm:$0xff]
    %v321 = vld [vmem:[#allocation2 + $0x738] sm:$0xff]
    %v322 = vld [vmem:[#allocation2 + $0x740] sm:$0xff]
    %v323 = vld [vmem:[#allocation2 + $0x748] sm:$0xff]
    %v324 = vld [vmem:[#allocation2 + $0x750] sm:$0xff]
    %v325 = vld [vmem:[#allocation2 + $0x758] sm:$0xff]
    %v326 = vld [vmem:[#allocation2 + $0x760] sm:$0xff]
    %v327 = vld [vmem:[#allocation2 + $0x768] sm:$0xff]
    %v328 = vld [vmem:[#allocation2 + $0x770] sm:$0xff]
    %v329 = vld [vmem:[#allocation2 + $0x778] sm:$0xff]
    %v330 = vld [vmem:[#allocation2 + $0x780] sm:$0xff]
    %v331 = vld [vmem:[#allocation2 + $0x788] sm:$0xff]
    %v332 = vld [vmem:[#allocation2 + $0x790] sm:$0xff]
    %v333 = vld [vmem:[#allocation2 + $0x798] sm:$0xff]
    %v334 = vld [vmem:[#allocation2 + $0x7a0] sm:$0xff]
    %v335 = vld [vmem:[#allocation2 + $0x7a8] sm:$0xff]
    %v336 = vld [vmem:[#allocation2 + $0x7b0] sm:$0xff]
    %v337 = vld [vmem:[#allocation2 + $0x7b8] sm:$0xff]
    %v338 = vld [vmem:[#allocation2 + $0x7c0] sm:$0xff]
    %v339 = vld [vmem:[#allocation2 + $0x7c8] sm:$0xff]
    %v340 = vld [vmem:[#allocation2 + $0x7d0] sm:$0xff]
    %v341 = vld [vmem:[#allocation2 + $0x7d8] sm:$0xff]
    %v342 = vld [vmem:[#allocation2 + $0x7e0] sm:$0xff]
    %v343 = vld [vmem:[#allocation2 + $0x7e8] sm:$0xff]
    %v344 = vld [vmem:[#allocation2 + $0x7f0] sm:$0xff]
    %v345 = vld [vmem:[#allocation2 + $0x7f8] sm:$0xff]
    %v346 = vld [vmem:[%s6] ss:$4 sm:$0x3]
    %v348 = vlaneseq
    %v349 = vshrl.u32 %v348, 7
    %v350 = vsub.s32 0, %v349
    %v351 = vrot.slane %v346, %v350
    %v352 = vlaneseq
    %v353 = vshrl.u32 %v352, 7
    %v354 = vsub.s32 1, %v353
    %v355 = vrot.slane %v346, %v354
    %v360 = vcombine.high %v87, %v87
    %v362 = vunpack.c.l.s4 1966171168
    %v363 = vunpack.c.0.s8 %v362
    %v364 = vlaneseq
    %v365 = vshrl.u32 %v364, 7
    %v366 = vsub.s32 %v363, %v365
    %v367 = vrot.slane %v87, %v366
    %v369 = vunpack.c.l.s4 1966171168
    %v370 = vunpack.c.0.s8 %v369
    %v371 = vlaneseq
    %v372 = vshrl.u32 %v371, 7
    %v373 = vsub.s32 %v370, %v372
    %v374 = vrot.slane %v360, %v373
    %v375 = vcombine.high %v367, %v367
    %v376 = vcombine.high %v374, %v374
    %v378 = vunpack.c.l.s4 1966171168
    %v379 = vunpack.c.0.s8 %v378
    %v380 = vlaneseq
    %v381 = vshrl.u32 %v380, 7
    %v382 = vsub.s32 %v379, %v381
    %v383 = vrot.slane %v367, %v382
    %v385 = vunpack.c.l.s4 1966171168
    %v386 = vunpack.c.0.s8 %v385
    %v387 = vlaneseq
    %v388 = vshrl.u32 %v387, 7
    %v389 = vsub.s32 %v386, %v388
    %v390 = vrot.slane %v374, %v389
    %v392 = vunpack.c.l.s4 1966171168
    %v393 = vunpack.c.0.s8 %v392
    %v394 = vlaneseq
    %v395 = vshrl.u32 %v394, 7
    %v396 = vsub.s32 %v393, %v395
    %v397 = vrot.slane %v375, %v396
    %v399 = vunpack.c.l.s4 1966171168
    %v400 = vunpack.c.0.s8 %v399
    %v401 = vlaneseq
    %v402 = vshrl.u32 %v401, 7
    %v403 = vsub.s32 %v400, %v402
    %v404 = vrot.slane %v376, %v403
    %v405 = vcombine.high %v383, %v383
    %v406 = vcombine.high %v390, %v390
    %v407 = vcombine.high %v397, %v397
    %v408 = vcombine.high %v404, %v404
    %v409 = vcombine.high %v88, %v88
    %v411 = vunpack.c.l.s4 1966171168
    %v412 = vunpack.c.0.s8 %v411
    %v413 = vlaneseq
    %v414 = vshrl.u32 %v413, 7
    %v415 = vsub.s32 %v412, %v414
    %v416 = vrot.slane %v88, %v415
    %v418 = vunpack.c.l.s4 1966171168
    %v419 = vunpack.c.0.s8 %v418
    %v420 = vlaneseq
    %v421 = vshrl.u32 %v420, 7
    %v422 = vsub.s32 %v419, %v421
    %v423 = vrot.slane %v409, %v422
    %v424 = vcombine.high %v416, %v416
    %v425 = vcombine.high %v423, %v423
    %v427 = vunpack.c.l.s4 1966171168
    %v428 = vunpack.c.0.s8 %v427
    %v429 = vlaneseq
    %v430 = vshrl.u32 %v429, 7
    %v431 = vsub.s32 %v428, %v430
    %v432 = vrot.slane %v416, %v431
    %v434 = vunpack.c.l.s4 1966171168
    %v435 = vunpack.c.0.s8 %v434
    %v436 = vlaneseq
    %v437 = vshrl.u32 %v436, 7
    %v438 = vsub.s32 %v435, %v437
    %v439 = vrot.slane %v423, %v438
    %v441 = vunpack.c.l.s4 1966171168
    %v442 = vunpack.c.0.s8 %v441
    %v443 = vlaneseq
    %v444 = vshrl.u32 %v443, 7
    %v445 = vsub.s32 %v442, %v444
    %v446 = vrot.slane %v424, %v445
    %v448 = vunpack.c.l.s4 1966171168
    %v449 = vunpack.c.0.s8 %v448
    %v450 = vlaneseq
    %v451 = vshrl.u32 %v450, 7
    %v452 = vsub.s32 %v449, %v451
    %v453 = vrot.slane %v425, %v452
    %v454 = vcombine.high %v432, %v432
    %v455 = vcombine.high %v439, %v439
    %v456 = vcombine.high %v446, %v446
    %v457 = vcombine.high %v453, %v453
    %v730 = vunpack.c.l.b16 %v90
    %v731 = vunpack.c.h.b16 %v90
    %v732 = vunpack.c.l.b16 %v91
    %v733 = vunpack.c.h.b16 %v91
    %v734 = vunpack.c.l.b16 %v92
    %v735 = vunpack.c.h.b16 %v92
    %v736 = vunpack.c.l.b16 %v93
    %v737 = vunpack.c.h.b16 %v93
    %v738 = vunpack.c.l.b16 %v94
    %v739 = vunpack.c.h.b16 %v94
    %v740 = vunpack.c.l.b16 %v95
    %v741 = vunpack.c.h.b16 %v95
    %v742 = vunpack.c.l.b16 %v96
    %v743 = vunpack.c.h.b16 %v96
    %v744 = vunpack.c.l.b16 %v97
    %v745 = vunpack.c.h.b16 %v97
    %v746 = vunpack.c.l.b16 %v98
    %v747 = vunpack.c.h.b16 %v98
    %v748 = vunpack.c.l.b16 %v99
    %v749 = vunpack.c.h.b16 %v99
    %v750 = vunpack.c.l.b16 %v100
    %v751 = vunpack.c.h.b16 %v100
    %v752 = vunpack.c.l.b16 %v101
    %v753 = vunpack.c.h.b16 %v101
    %v754 = vunpack.c.l.b16 %v102
    %v755 = vunpack.c.h.b16 %v102
    %v756 = vunpack.c.l.b16 %v103
    %v757 = vunpack.c.h.b16 %v103
    %v758 = vunpack.c.l.b16 %v104
    %v759 = vunpack.c.h.b16 %v104
    %v760 = vunpack.c.l.b16 %v105
    %v761 = vunpack.c.h.b16 %v105
    %v762 = vunpack.c.l.b16 %v106
    %v763 = vunpack.c.h.b16 %v106
    %v764 = vunpack.c.l.b16 %v107
    %v765 = vunpack.c.h.b16 %v107
    %v766 = vunpack.c.l.b16 %v108
    %v767 = vunpack.c.h.b16 %v108
    %v768 = vunpack.c.l.b16 %v109
    %v769 = vunpack.c.h.b16 %v109
    %v770 = vunpack.c.l.b16 %v110
    %v771 = vunpack.c.h.b16 %v110
    %v772 = vunpack.c.l.b16 %v111
    %v773 = vunpack.c.h.b16 %v111
    %v774 = vunpack.c.l.b16 %v112
    %v775 = vunpack.c.h.b16 %v112
    %v776 = vunpack.c.l.b16 %v113
    %v777 = vunpack.c.h.b16 %v113
    %v778 = vunpack.c.l.b16 %v114
    %v779 = vunpack.c.h.b16 %v114
    %v780 = vunpack.c.l.b16 %v115
    %v781 = vunpack.c.h.b16 %v115
    %v782 = vunpack.c.l.b16 %v116
    %v783 = vunpack.c.h.b16 %v116
    %v784 = vunpack.c.l.b16 %v117
    %v785 = vunpack.c.h.b16 %v117
    %v786 = vunpack.c.l.b16 %v118
    %v787 = vunpack.c.h.b16 %v118
    %v788 = vunpack.c.l.b16 %v119
    %v789 = vunpack.c.h.b16 %v119
    %v790 = vunpack.c.l.b16 %v120
    %v791 = vunpack.c.h.b16 %v120
    %v792 = vunpack.c.l.b16 %v121
    %v793 = vunpack.c.h.b16 %v121
    %v794 = vunpack.c.l.b16 %v122
    %v795 = vunpack.c.h.b16 %v122
    %v796 = vunpack.c.l.b16 %v123
    %v797 = vunpack.c.h.b16 %v123
    %v798 = vunpack.c.l.b16 %v124
    %v799 = vunpack.c.h.b16 %v124
    %v800 = vunpack.c.l.b16 %v125
    %v801 = vunpack.c.h.b16 %v125
    %v802 = vunpack.c.l.b16 %v126
    %v803 = vunpack.c.h.b16 %v126
    %v804 = vunpack.c.l.b16 %v127
    %v805 = vunpack.c.h.b16 %v127
    %v806 = vunpack.c.l.b16 %v128
    %v807 = vunpack.c.h.b16 %v128
    %v808 = vunpack.c.l.b16 %v129
    %v809 = vunpack.c.h.b16 %v129
    %v810 = vunpack.c.l.b16 %v130
    %v811 = vunpack.c.h.b16 %v130
    %v812 = vunpack.c.l.b16 %v131
    %v813 = vunpack.c.h.b16 %v131
    %v814 = vunpack.c.l.b16 %v132
    %v815 = vunpack.c.h.b16 %v132
    %v816 = vunpack.c.l.b16 %v133
    %v817 = vunpack.c.h.b16 %v133
    %v818 = vunpack.c.l.b16 %v134
    %v819 = vunpack.c.h.b16 %v134
    %v820 = vunpack.c.l.b16 %v135
    %v821 = vunpack.c.h.b16 %v135
    %v822 = vunpack.c.l.b16 %v136
    %v823 = vunpack.c.h.b16 %v136
    %v824 = vunpack.c.l.b16 %v137
    %v825 = vunpack.c.h.b16 %v137
    %v826 = vunpack.c.l.b16 %v138
    %v827 = vunpack.c.h.b16 %v138
    %v828 = vunpack.c.l.b16 %v139
    %v829 = vunpack.c.h.b16 %v139
    %v830 = vunpack.c.l.b16 %v140
    %v831 = vunpack.c.h.b16 %v140
    %v832 = vunpack.c.l.b16 %v141
    %v833 = vunpack.c.h.b16 %v141
    %v834 = vunpack.c.l.b16 %v142
    %v835 = vunpack.c.h.b16 %v142
    %v836 = vunpack.c.l.b16 %v143
    %v837 = vunpack.c.h.b16 %v143
    %v838 = vunpack.c.l.b16 %v144
    %v839 = vunpack.c.h.b16 %v144
    %v840 = vunpack.c.l.b16 %v145
    %v841 = vunpack.c.h.b16 %v145
    %v842 = vunpack.c.l.b16 %v146
    %v843 = vunpack.c.h.b16 %v146
    %v844 = vunpack.c.l.b16 %v147
    %v845 = vunpack.c.h.b16 %v147
    %v846 = vunpack.c.l.b16 %v148
    %v847 = vunpack.c.h.b16 %v148
    %v848 = vunpack.c.l.b16 %v149
    %v849 = vunpack.c.h.b16 %v149
    %v850 = vunpack.c.l.b16 %v150
    %v851 = vunpack.c.h.b16 %v150
    %v852 = vunpack.c.l.b16 %v151
    %v853 = vunpack.c.h.b16 %v151
    %v854 = vunpack.c.l.b16 %v152
    %v855 = vunpack.c.h.b16 %v152
    %v856 = vunpack.c.l.b16 %v153
    %v857 = vunpack.c.h.b16 %v153
    %v858 = vunpack.c.l.b16 %v154
    %v859 = vunpack.c.h.b16 %v154
    %v860 = vunpack.c.l.b16 %v155
    %v861 = vunpack.c.h.b16 %v155
    %v862 = vunpack.c.l.b16 %v156
    %v863 = vunpack.c.h.b16 %v156
    %v864 = vunpack.c.l.b16 %v157
    %v865 = vunpack.c.h.b16 %v157
    %v866 = vunpack.c.l.b16 %v158
    %v867 = vunpack.c.h.b16 %v158
    %v868 = vunpack.c.l.b16 %v159
    %v869 = vunpack.c.h.b16 %v159
    %v870 = vunpack.c.l.b16 %v160
    %v871 = vunpack.c.h.b16 %v160
    %v872 = vunpack.c.l.b16 %v161
    %v873 = vunpack.c.h.b16 %v161
    %v874 = vunpack.c.l.b16 %v162
    %v875 = vunpack.c.h.b16 %v162
    %v876 = vunpack.c.l.b16 %v163
    %v877 = vunpack.c.h.b16 %v163
    %v878 = vunpack.c.l.b16 %v164
    %v879 = vunpack.c.h.b16 %v164
    %v880 = vunpack.c.l.b16 %v165
    %v881 = vunpack.c.h.b16 %v165
    %v882 = vunpack.c.l.b16 %v166
    %v883 = vunpack.c.h.b16 %v166
    %v884 = vunpack.c.l.b16 %v167
    %v885 = vunpack.c.h.b16 %v167
    %v886 = vunpack.c.l.b16 %v168
    %v887 = vunpack.c.h.b16 %v168
    %v888 = vunpack.c.l.b16 %v169
    %v889 = vunpack.c.h.b16 %v169
    %v890 = vunpack.c.l.b16 %v170
    %v891 = vunpack.c.h.b16 %v170
    %v892 = vunpack.c.l.b16 %v171
    %v893 = vunpack.c.h.b16 %v171
    %v894 = vunpack.c.l.b16 %v172
    %v895 = vunpack.c.h.b16 %v172
    %v896 = vunpack.c.l.b16 %v173
    %v897 = vunpack.c.h.b16 %v173
    %v898 = vunpack.c.l.b16 %v174
    %v899 = vunpack.c.h.b16 %v174
    %v900 = vunpack.c.l.b16 %v175
    %v901 = vunpack.c.h.b16 %v175
    %v902 = vunpack.c.l.b16 %v176
    %v903 = vunpack.c.h.b16 %v176
    %v904 = vunpack.c.l.b16 %v177
    %v905 = vunpack.c.h.b16 %v177
    %v906 = vunpack.c.l.b16 %v178
    %v907 = vunpack.c.h.b16 %v178
    %v908 = vunpack.c.l.b16 %v179
    %v909 = vunpack.c.h.b16 %v179
    %v910 = vunpack.c.l.b16 %v180
    %v911 = vunpack.c.h.b16 %v180
    %v912 = vunpack.c.l.b16 %v181
    %v913 = vunpack.c.h.b16 %v181
    %v914 = vunpack.c.l.b16 %v182
    %v915 = vunpack.c.h.b16 %v182
    %v916 = vunpack.c.l.b16 %v183
    %v917 = vunpack.c.h.b16 %v183
    %v918 = vunpack.c.l.b16 %v184
    %v919 = vunpack.c.h.b16 %v184
    %v920 = vunpack.c.l.b16 %v185
    %v921 = vunpack.c.h.b16 %v185
    %v922 = vunpack.c.l.b16 %v186
    %v923 = vunpack.c.h.b16 %v186
    %v924 = vunpack.c.l.b16 %v187
    %v925 = vunpack.c.h.b16 %v187
    %v926 = vunpack.c.l.b16 %v188
    %v927 = vunpack.c.h.b16 %v188
    %v928 = vunpack.c.l.b16 %v189
    %v929 = vunpack.c.h.b16 %v189
    %v930 = vunpack.c.l.b16 %v190
    %v931 = vunpack.c.h.b16 %v190
    %v932 = vunpack.c.l.b16 %v191
    %v933 = vunpack.c.h.b16 %v191
    %v934 = vunpack.c.l.b16 %v192
    %v935 = vunpack.c.h.b16 %v192
    %v936 = vunpack.c.l.b16 %v193
    %v937 = vunpack.c.h.b16 %v193
    %v938 = vunpack.c.l.b16 %v194
    %v939 = vunpack.c.h.b16 %v194
    %v940 = vunpack.c.l.b16 %v195
    %v941 = vunpack.c.h.b16 %v195
    %v942 = vunpack.c.l.b16 %v196
    %v943 = vunpack.c.h.b16 %v196
    %v944 = vunpack.c.l.b16 %v197
    %v945 = vunpack.c.h.b16 %v197
    %v946 = vunpack.c.l.b16 %v198
    %v947 = vunpack.c.h.b16 %v198
    %v948 = vunpack.c.l.b16 %v199
    %v949 = vunpack.c.h.b16 %v199
    %v950 = vunpack.c.l.b16 %v200
    %v951 = vunpack.c.h.b16 %v200
    %v952 = vunpack.c.l.b16 %v201
    %v953 = vunpack.c.h.b16 %v201
    %v954 = vunpack.c.l.b16 %v202
    %v955 = vunpack.c.h.b16 %v202
    %v956 = vunpack.c.l.b16 %v203
    %v957 = vunpack.c.h.b16 %v203
    %v958 = vunpack.c.l.b16 %v204
    %v959 = vunpack.c.h.b16 %v204
    %v960 = vunpack.c.l.b16 %v205
    %v961 = vunpack.c.h.b16 %v205
    %v962 = vunpack.c.l.b16 %v206
    %v963 = vunpack.c.h.b16 %v206
    %v964 = vunpack.c.l.b16 %v207
    %v965 = vunpack.c.h.b16 %v207
    %v966 = vunpack.c.l.b16 %v208
    %v967 = vunpack.c.h.b16 %v208
    %v968 = vunpack.c.l.b16 %v209
    %v969 = vunpack.c.h.b16 %v209
    %v970 = vunpack.c.l.b16 %v210
    %v971 = vunpack.c.h.b16 %v210
    %v972 = vunpack.c.l.b16 %v211
    %v973 = vunpack.c.h.b16 %v211
    %v974 = vunpack.c.l.b16 %v212
    %v975 = vunpack.c.h.b16 %v212
    %v976 = vunpack.c.l.b16 %v213
    %v977 = vunpack.c.h.b16 %v213
    %v978 = vunpack.c.l.b16 %v214
    %v979 = vunpack.c.h.b16 %v214
    %v980 = vunpack.c.l.b16 %v215
    %v981 = vunpack.c.h.b16 %v215
    %v982 = vunpack.c.l.b16 %v216
    %v983 = vunpack.c.h.b16 %v216
    %v984 = vunpack.c.l.b16 %v217
    %v985 = vunpack.c.h.b16 %v217
    %v986 = vunpack.c.l.b16 %v218
    %v987 = vunpack.c.h.b16 %v218
    %v988 = vunpack.c.l.b16 %v219
    %v989 = vunpack.c.h.b16 %v219
    %v990 = vunpack.c.l.b16 %v220
    %v991 = vunpack.c.h.b16 %v220
    %v992 = vunpack.c.l.b16 %v221
    %v993 = vunpack.c.h.b16 %v221
    %v994 = vunpack.c.l.b16 %v222
    %v995 = vunpack.c.h.b16 %v222
    %v996 = vunpack.c.l.b16 %v223
    %v997 = vunpack.c.h.b16 %v223
    %v998 = vunpack.c.l.b16 %v224
    %v999 = vunpack.c.h.b16 %v224
    %v1000 = vunpack.c.l.b16 %v225
    %v1001 = vunpack.c.h.b16 %v225
    %v1002 = vunpack.c.l.b16 %v226
    %v1003 = vunpack.c.h.b16 %v226
    %v1004 = vunpack.c.l.b16 %v227
    %v1005 = vunpack.c.h.b16 %v227
    %v1006 = vunpack.c.l.b16 %v228
    %v1007 = vunpack.c.h.b16 %v228
    %v1008 = vunpack.c.l.b16 %v229
    %v1009 = vunpack.c.h.b16 %v229
    %v1010 = vunpack.c.l.b16 %v230
    %v1011 = vunpack.c.h.b16 %v230
    %v1012 = vunpack.c.l.b16 %v231
    %v1013 = vunpack.c.h.b16 %v231
    %v1014 = vunpack.c.l.b16 %v232
    %v1015 = vunpack.c.h.b16 %v232
    %v1016 = vunpack.c.l.b16 %v233
    %v1017 = vunpack.c.h.b16 %v233
    %v1018 = vunpack.c.l.b16 %v234
    %v1019 = vunpack.c.h.b16 %v234
    %v1020 = vunpack.c.l.b16 %v235
    %v1021 = vunpack.c.h.b16 %v235
    %v1022 = vunpack.c.l.b16 %v236
    %v1023 = vunpack.c.h.b16 %v236
    %v1024 = vunpack.c.l.b16 %v237
    %v1025 = vunpack.c.h.b16 %v237
    %v1026 = vunpack.c.l.b16 %v238
    %v1027 = vunpack.c.h.b16 %v238
    %v1028 = vunpack.c.l.b16 %v239
    %v1029 = vunpack.c.h.b16 %v239
    %v1030 = vunpack.c.l.b16 %v240
    %v1031 = vunpack.c.h.b16 %v240
    %v1032 = vunpack.c.l.b16 %v241
    %v1033 = vunpack.c.h.b16 %v241
    %v1034 = vunpack.c.l.b16 %v242
    %v1035 = vunpack.c.h.b16 %v242
    %v1036 = vunpack.c.l.b16 %v243
    %v1037 = vunpack.c.h.b16 %v243
    %v1038 = vunpack.c.l.b16 %v244
    %v1039 = vunpack.c.h.b16 %v244
    %v1040 = vunpack.c.l.b16 %v245
    %v1041 = vunpack.c.h.b16 %v245
    %v1042 = vunpack.c.l.b16 %v246
    %v1043 = vunpack.c.h.b16 %v246
    %v1044 = vunpack.c.l.b16 %v247
    %v1045 = vunpack.c.h.b16 %v247
    %v1046 = vunpack.c.l.b16 %v248
    %v1047 = vunpack.c.h.b16 %v248
    %v1048 = vunpack.c.l.b16 %v249
    %v1049 = vunpack.c.h.b16 %v249
    %v1050 = vunpack.c.l.b16 %v250
    %v1051 = vunpack.c.h.b16 %v250
    %v1052 = vunpack.c.l.b16 %v251
    %v1053 = vunpack.c.h.b16 %v251
    %v1054 = vunpack.c.l.b16 %v252
    %v1055 = vunpack.c.h.b16 %v252
    %v1056 = vunpack.c.l.b16 %v253
    %v1057 = vunpack.c.h.b16 %v253
    %v1058 = vunpack.c.l.b16 %v254
    %v1059 = vunpack.c.h.b16 %v254
    %v1060 = vunpack.c.l.b16 %v255
    %v1061 = vunpack.c.h.b16 %v255
    %v1062 = vunpack.c.l.b16 %v256
    %v1063 = vunpack.c.h.b16 %v256
    %v1064 = vunpack.c.l.b16 %v257
    %v1065 = vunpack.c.h.b16 %v257
    %v1066 = vunpack.c.l.b16 %v258
    %v1067 = vunpack.c.h.b16 %v258
    %v1068 = vunpack.c.l.b16 %v259
    %v1069 = vunpack.c.h.b16 %v259
    %v1070 = vunpack.c.l.b16 %v260
    %v1071 = vunpack.c.h.b16 %v260
    %v1072 = vunpack.c.l.b16 %v261
    %v1073 = vunpack.c.h.b16 %v261
    %v1074 = vunpack.c.l.b16 %v262
    %v1075 = vunpack.c.h.b16 %v262
    %v1076 = vunpack.c.l.b16 %v263
    %v1077 = vunpack.c.h.b16 %v263
    %v1078 = vunpack.c.l.b16 %v264
    %v1079 = vunpack.c.h.b16 %v264
    %v1080 = vunpack.c.l.b16 %v265
    %v1081 = vunpack.c.h.b16 %v265
    %v1082 = vunpack.c.l.b16 %v266
    %v1083 = vunpack.c.h.b16 %v266
    %v1084 = vunpack.c.l.b16 %v267
    %v1085 = vunpack.c.h.b16 %v267
    %v1086 = vunpack.c.l.b16 %v268
    %v1087 = vunpack.c.h.b16 %v268
    %v1088 = vunpack.c.l.b16 %v269
    %v1089 = vunpack.c.h.b16 %v269
    %v1090 = vunpack.c.l.b16 %v270
    %v1091 = vunpack.c.h.b16 %v270
    %v1092 = vunpack.c.l.b16 %v271
    %v1093 = vunpack.c.h.b16 %v271
    %v1094 = vunpack.c.l.b16 %v272
    %v1095 = vunpack.c.h.b16 %v272
    %v1096 = vunpack.c.l.b16 %v273
    %v1097 = vunpack.c.h.b16 %v273
    %v1098 = vunpack.c.l.b16 %v274
    %v1099 = vunpack.c.h.b16 %v274
    %v1100 = vunpack.c.l.b16 %v275
    %v1101 = vunpack.c.h.b16 %v275
    %v1102 = vunpack.c.l.b16 %v276
    %v1103 = vunpack.c.h.b16 %v276
    %v1104 = vunpack.c.l.b16 %v277
    %v1105 = vunpack.c.h.b16 %v277
    %v1106 = vunpack.c.l.b16 %v278
    %v1107 = vunpack.c.h.b16 %v278
    %v1108 = vunpack.c.l.b16 %v279
    %v1109 = vunpack.c.h.b16 %v279
    %v1110 = vunpack.c.l.b16 %v280
    %v1111 = vunpack.c.h.b16 %v280
    %v1112 = vunpack.c.l.b16 %v281
    %v1113 = vunpack.c.h.b16 %v281
    %v1114 = vunpack.c.l.b16 %v282
    %v1115 = vunpack.c.h.b16 %v282
    %v1116 = vunpack.c.l.b16 %v283
    %v1117 = vunpack.c.h.b16 %v283
    %v1118 = vunpack.c.l.b16 %v284
    %v1119 = vunpack.c.h.b16 %v284
    %v1120 = vunpack.c.l.b16 %v285
    %v1121 = vunpack.c.h.b16 %v285
    %v1122 = vunpack.c.l.b16 %v286
    %v1123 = vunpack.c.h.b16 %v286
    %v1124 = vunpack.c.l.b16 %v287
    %v1125 = vunpack.c.h.b16 %v287
    %v1126 = vunpack.c.l.b16 %v288
    %v1127 = vunpack.c.h.b16 %v288
    %v1128 = vunpack.c.l.b16 %v289
    %v1129 = vunpack.c.h.b16 %v289
    %v1130 = vunpack.c.l.b16 %v290
    %v1131 = vunpack.c.h.b16 %v290
    %v1132 = vunpack.c.l.b16 %v291
    %v1133 = vunpack.c.h.b16 %v291
    %v1134 = vunpack.c.l.b16 %v292
    %v1135 = vunpack.c.h.b16 %v292
    %v1136 = vunpack.c.l.b16 %v293
    %v1137 = vunpack.c.h.b16 %v293
    %v1138 = vunpack.c.l.b16 %v294
    %v1139 = vunpack.c.h.b16 %v294
    %v1140 = vunpack.c.l.b16 %v295
    %v1141 = vunpack.c.h.b16 %v295
    %v1142 = vunpack.c.l.b16 %v296
    %v1143 = vunpack.c.h.b16 %v296
    %v1144 = vunpack.c.l.b16 %v297
    %v1145 = vunpack.c.h.b16 %v297
    %v1146 = vunpack.c.l.b16 %v298
    %v1147 = vunpack.c.h.b16 %v298
    %v1148 = vunpack.c.l.b16 %v299
    %v1149 = vunpack.c.h.b16 %v299
    %v1150 = vunpack.c.l.b16 %v300
    %v1151 = vunpack.c.h.b16 %v300
    %v1152 = vunpack.c.l.b16 %v301
    %v1153 = vunpack.c.h.b16 %v301
    %v1154 = vunpack.c.l.b16 %v302
    %v1155 = vunpack.c.h.b16 %v302
    %v1156 = vunpack.c.l.b16 %v303
    %v1157 = vunpack.c.h.b16 %v303
    %v1158 = vunpack.c.l.b16 %v304
    %v1159 = vunpack.c.h.b16 %v304
    %v1160 = vunpack.c.l.b16 %v305
    %v1161 = vunpack.c.h.b16 %v305
    %v1162 = vunpack.c.l.b16 %v306
    %v1163 = vunpack.c.h.b16 %v306
    %v1164 = vunpack.c.l.b16 %v307
    %v1165 = vunpack.c.h.b16 %v307
    %v1166 = vunpack.c.l.b16 %v308
    %v1167 = vunpack.c.h.b16 %v308
    %v1168 = vunpack.c.l.b16 %v309
    %v1169 = vunpack.c.h.b16 %v309
    %v1170 = vunpack.c.l.b16 %v310
    %v1171 = vunpack.c.h.b16 %v310
    %v1172 = vunpack.c.l.b16 %v311
    %v1173 = vunpack.c.h.b16 %v311
    %v1174 = vunpack.c.l.b16 %v312
    %v1175 = vunpack.c.h.b16 %v312
    %v1176 = vunpack.c.l.b16 %v313
    %v1177 = vunpack.c.h.b16 %v313
    %v1178 = vunpack.c.l.b16 %v314
    %v1179 = vunpack.c.h.b16 %v314
    %v1180 = vunpack.c.l.b16 %v315
    %v1181 = vunpack.c.h.b16 %v315
    %v1182 = vunpack.c.l.b16 %v316
    %v1183 = vunpack.c.h.b16 %v316
    %v1184 = vunpack.c.l.b16 %v317
    %v1185 = vunpack.c.h.b16 %v317
    %v1186 = vunpack.c.l.b16 %v318
    %v1187 = vunpack.c.h.b16 %v318
    %v1188 = vunpack.c.l.b16 %v319
    %v1189 = vunpack.c.h.b16 %v319
    %v1190 = vunpack.c.l.b16 %v320
    %v1191 = vunpack.c.h.b16 %v320
    %v1192 = vunpack.c.l.b16 %v321
    %v1193 = vunpack.c.h.b16 %v321
    %v1194 = vunpack.c.l.b16 %v322
    %v1195 = vunpack.c.h.b16 %v322
    %v1196 = vunpack.c.l.b16 %v323
    %v1197 = vunpack.c.h.b16 %v323
    %v1198 = vunpack.c.l.b16 %v324
    %v1199 = vunpack.c.h.b16 %v324
    %v1200 = vunpack.c.l.b16 %v325
    %v1201 = vunpack.c.h.b16 %v325
    %v1202 = vunpack.c.l.b16 %v326
    %v1203 = vunpack.c.h.b16 %v326
    %v1204 = vunpack.c.l.b16 %v327
    %v1205 = vunpack.c.h.b16 %v327
    %v1206 = vunpack.c.l.b16 %v328
    %v1207 = vunpack.c.h.b16 %v328
    %v1208 = vunpack.c.l.b16 %v329
    %v1209 = vunpack.c.h.b16 %v329
    %v1210 = vunpack.c.l.b16 %v330
    %v1211 = vunpack.c.h.b16 %v330
    %v1212 = vunpack.c.l.b16 %v331
    %v1213 = vunpack.c.h.b16 %v331
    %v1214 = vunpack.c.l.b16 %v332
    %v1215 = vunpack.c.h.b16 %v332
    %v1216 = vunpack.c.l.b16 %v333
    %v1217 = vunpack.c.h.b16 %v333
    %v1218 = vunpack.c.l.b16 %v334
    %v1219 = vunpack.c.h.b16 %v334
    %v1220 = vunpack.c.l.b16 %v335
    %v1221 = vunpack.c.h.b16 %v335
    %v1222 = vunpack.c.l.b16 %v336
    %v1223 = vunpack.c.h.b16 %v336
    %v1224 = vunpack.c.l.b16 %v337
    %v1225 = vunpack.c.h.b16 %v337
    %v1226 = vunpack.c.l.b16 %v338
    %v1227 = vunpack.c.h.b16 %v338
    %v1228 = vunpack.c.l.b16 %v339
    %v1229 = vunpack.c.h.b16 %v339
    %v1230 = vunpack.c.l.b16 %v340
    %v1231 = vunpack.c.h.b16 %v340
    %v1232 = vunpack.c.l.b16 %v341
    %v1233 = vunpack.c.h.b16 %v341
    %v1234 = vunpack.c.l.b16 %v342
    %v1235 = vunpack.c.h.b16 %v342
    %v1236 = vunpack.c.l.b16 %v343
    %v1237 = vunpack.c.h.b16 %v343
    %v1238 = vunpack.c.l.b16 %v344
    %v1239 = vunpack.c.h.b16 %v344
    %v1240 = vunpack.c.l.b16 %v345
    %v1241 = vunpack.c.h.b16 %v345
    %v1242 = vpack.c.b16 %v732, %v730
    %v1243 = vpack.c.b16 %v733, %v731
    %v1244 = vpack.c.b16 %v736, %v734
    %v1245 = vpack.c.b16 %v737, %v735
    %v1246 = vpack.c.b16 %v740, %v738
    %v1247 = vpack.c.b16 %v741, %v739
    %v1248 = vpack.c.b16 %v744, %v742
    %v1249 = vpack.c.b16 %v745, %v743
    %v1250 = vpack.c.b16 %v748, %v746
    %v1251 = vpack.c.b16 %v749, %v747
    %v1252 = vpack.c.b16 %v752, %v750
    %v1253 = vpack.c.b16 %v753, %v751
    %v1254 = vpack.c.b16 %v756, %v754
    %v1255 = vpack.c.b16 %v757, %v755
    %v1256 = vpack.c.b16 %v760, %v758
    %v1257 = vpack.c.b16 %v761, %v759
    %v1258 = vpack.c.b16 %v764, %v762
    %v1259 = vpack.c.b16 %v765, %v763
    %v1260 = vpack.c.b16 %v768, %v766
    %v1261 = vpack.c.b16 %v769, %v767
    %v1262 = vpack.c.b16 %v772, %v770
    %v1263 = vpack.c.b16 %v773, %v771
    %v1264 = vpack.c.b16 %v776, %v774
    %v1265 = vpack.c.b16 %v777, %v775
    %v1266 = vpack.c.b16 %v780, %v778
    %v1267 = vpack.c.b16 %v781, %v779
    %v1268 = vpack.c.b16 %v784, %v782
    %v1269 = vpack.c.b16 %v785, %v783
    %v1270 = vpack.c.b16 %v788, %v786
    %v1271 = vpack.c.b16 %v789, %v787
    %v1272 = vpack.c.b16 %v792, %v790
    %v1273 = vpack.c.b16 %v793, %v791
    %v1274 = vpack.c.b16 %v796, %v794
    %v1275 = vpack.c.b16 %v797, %v795
    %v1276 = vpack.c.b16 %v800, %v798
    %v1277 = vpack.c.b16 %v801, %v799
    %v1278 = vpack.c.b16 %v804, %v802
    %v1279 = vpack.c.b16 %v805, %v803
    %v1280 = vpack.c.b16 %v808, %v806
    %v1281 = vpack.c.b16 %v809, %v807
    %v1282 = vpack.c.b16 %v812, %v810
    %v1283 = vpack.c.b16 %v813, %v811
    %v1284 = vpack.c.b16 %v816, %v814
    %v1285 = vpack.c.b16 %v817, %v815
    %v1286 = vpack.c.b16 %v820, %v818
    %v1287 = vpack.c.b16 %v821, %v819
    %v1288 = vpack.c.b16 %v824, %v822
    %v1289 = vpack.c.b16 %v825, %v823
    %v1290 = vpack.c.b16 %v828, %v826
    %v1291 = vpack.c.b16 %v829, %v827
    %v1292 = vpack.c.b16 %v832, %v830
    %v1293 = vpack.c.b16 %v833, %v831
    %v1294 = vpack.c.b16 %v836, %v834
    %v1295 = vpack.c.b16 %v837, %v835
    %v1296 = vpack.c.b16 %v840, %v838
    %v1297 = vpack.c.b16 %v841, %v839
    %v1298 = vpack.c.b16 %v844, %v842
    %v1299 = vpack.c.b16 %v845, %v843
    %v1300 = vpack.c.b16 %v848, %v846
    %v1301 = vpack.c.b16 %v849, %v847
    %v1302 = vpack.c.b16 %v852, %v850
    %v1303 = vpack.c.b16 %v853, %v851
    %v1304 = vpack.c.b16 %v856, %v854
    %v1305 = vpack.c.b16 %v857, %v855
    %v1306 = vpack.c.b16 %v860, %v858
    %v1307 = vpack.c.b16 %v861, %v859
    %v1308 = vpack.c.b16 %v864, %v862
    %v1309 = vpack.c.b16 %v865, %v863
    %v1310 = vpack.c.b16 %v868, %v866
    %v1311 = vpack.c.b16 %v869, %v867
    %v1312 = vpack.c.b16 %v872, %v870
    %v1313 = vpack.c.b16 %v873, %v871
    %v1314 = vpack.c.b16 %v876, %v874
    %v1315 = vpack.c.b16 %v877, %v875
    %v1316 = vpack.c.b16 %v880, %v878
    %v1317 = vpack.c.b16 %v881, %v879
    %v1318 = vpack.c.b16 %v884, %v882
    %v1319 = vpack.c.b16 %v885, %v883
    %v1320 = vpack.c.b16 %v888, %v886
    %v1321 = vpack.c.b16 %v889, %v887
    %v1322 = vpack.c.b16 %v892, %v890
    %v1323 = vpack.c.b16 %v893, %v891
    %v1324 = vpack.c.b16 %v896, %v894
    %v1325 = vpack.c.b16 %v897, %v895
    %v1326 = vpack.c.b16 %v900, %v898
    %v1327 = vpack.c.b16 %v901, %v899
    %v1328 = vpack.c.b16 %v904, %v902
    %v1329 = vpack.c.b16 %v905, %v903
    %v1330 = vpack.c.b16 %v908, %v906
    %v1331 = vpack.c.b16 %v909, %v907
    %v1332 = vpack.c.b16 %v912, %v910
    %v1333 = vpack.c.b16 %v913, %v911
    %v1334 = vpack.c.b16 %v916, %v914
    %v1335 = vpack.c.b16 %v917, %v915
    %v1336 = vpack.c.b16 %v920, %v918
    %v1337 = vpack.c.b16 %v921, %v919
    %v1338 = vpack.c.b16 %v924, %v922
    %v1339 = vpack.c.b16 %v925, %v923
    %v1340 = vpack.c.b16 %v928, %v926
    %v1341 = vpack.c.b16 %v929, %v927
    %v1342 = vpack.c.b16 %v932, %v930
    %v1343 = vpack.c.b16 %v933, %v931
    %v1344 = vpack.c.b16 %v936, %v934
    %v1345 = vpack.c.b16 %v937, %v935
    %v1346 = vpack.c.b16 %v940, %v938
    %v1347 = vpack.c.b16 %v941, %v939
    %v1348 = vpack.c.b16 %v944, %v942
    %v1349 = vpack.c.b16 %v945, %v943
    %v1350 = vpack.c.b16 %v948, %v946
    %v1351 = vpack.c.b16 %v949, %v947
    %v1352 = vpack.c.b16 %v952, %v950
    %v1353 = vpack.c.b16 %v953, %v951
    %v1354 = vpack.c.b16 %v956, %v954
    %v1355 = vpack.c.b16 %v957, %v955
    %v1356 = vpack.c.b16 %v960, %v958
    %v1357 = vpack.c.b16 %v961, %v959
    %v1358 = vpack.c.b16 %v964, %v962
    %v1359 = vpack.c.b16 %v965, %v963
    %v1360 = vpack.c.b16 %v968, %v966
    %v1361 = vpack.c.b16 %v969, %v967
    %v1362 = vpack.c.b16 %v972, %v970
    %v1363 = vpack.c.b16 %v973, %v971
    %v1364 = vpack.c.b16 %v976, %v974
    %v1365 = vpack.c.b16 %v977, %v975
    %v1366 = vpack.c.b16 %v980, %v978
    %v1367 = vpack.c.b16 %v981, %v979
    %v1368 = vpack.c.b16 %v984, %v982
    %v1369 = vpack.c.b16 %v985, %v983
    %v1370 = vpack.c.b16 %v988, %v986
    %v1371 = vpack.c.b16 %v989, %v987
    %v1372 = vpack.c.b16 %v992, %v990
    %v1373 = vpack.c.b16 %v993, %v991
    %v1374 = vpack.c.b16 %v996, %v994
    %v1375 = vpack.c.b16 %v997, %v995
    %v1376 = vpack.c.b16 %v1000, %v998
    %v1377 = vpack.c.b16 %v1001, %v999
    %v1378 = vpack.c.b16 %v1004, %v1002
    %v1379 = vpack.c.b16 %v1005, %v1003
    %v1380 = vpack.c.b16 %v1008, %v1006
    %v1381 = vpack.c.b16 %v1009, %v1007
    %v1382 = vpack.c.b16 %v1012, %v1010
    %v1383 = vpack.c.b16 %v1013, %v1011
    %v1384 = vpack.c.b16 %v1016, %v1014
    %v1385 = vpack.c.b16 %v1017, %v1015
    %v1386 = vpack.c.b16 %v1020, %v1018
    %v1387 = vpack.c.b16 %v1021, %v1019
    %v1388 = vpack.c.b16 %v1024, %v1022
    %v1389 = vpack.c.b16 %v1025, %v1023
    %v1390 = vpack.c.b16 %v1028, %v1026
    %v1391 = vpack.c.b16 %v1029, %v1027
    %v1392 = vpack.c.b16 %v1032, %v1030
    %v1393 = vpack.c.b16 %v1033, %v1031
    %v1394 = vpack.c.b16 %v1036, %v1034
    %v1395 = vpack.c.b16 %v1037, %v1035
    %v1396 = vpack.c.b16 %v1040, %v1038
    %v1397 = vpack.c.b16 %v1041, %v1039
    %v1398 = vpack.c.b16 %v1044, %v1042
    %v1399 = vpack.c.b16 %v1045, %v1043
    %v1400 = vpack.c.b16 %v1048, %v1046
    %v1401 = vpack.c.b16 %v1049, %v1047
    %v1402 = vpack.c.b16 %v1052, %v1050
    %v1403 = vpack.c.b16 %v1053, %v1051
    %v1404 = vpack.c.b16 %v1056, %v1054
    %v1405 = vpack.c.b16 %v1057, %v1055
    %v1406 = vpack.c.b16 %v1060, %v1058
    %v1407 = vpack.c.b16 %v1061, %v1059
    %v1408 = vpack.c.b16 %v1064, %v1062
    %v1409 = vpack.c.b16 %v1065, %v1063
    %v1410 = vpack.c.b16 %v1068, %v1066
    %v1411 = vpack.c.b16 %v1069, %v1067
    %v1412 = vpack.c.b16 %v1072, %v1070
    %v1413 = vpack.c.b16 %v1073, %v1071
    %v1414 = vpack.c.b16 %v1076, %v1074
    %v1415 = vpack.c.b16 %v1077, %v1075
    %v1416 = vpack.c.b16 %v1080, %v1078
    %v1417 = vpack.c.b16 %v1081, %v1079
    %v1418 = vpack.c.b16 %v1084, %v1082
    %v1419 = vpack.c.b16 %v1085, %v1083
    %v1420 = vpack.c.b16 %v1088, %v1086
    %v1421 = vpack.c.b16 %v1089, %v1087
    %v1422 = vpack.c.b16 %v1092, %v1090
    %v1423 = vpack.c.b16 %v1093, %v1091
    %v1424 = vpack.c.b16 %v1096, %v1094
    %v1425 = vpack.c.b16 %v1097, %v1095
    %v1426 = vpack.c.b16 %v1100, %v1098
    %v1427 = vpack.c.b16 %v1101, %v1099
    %v1428 = vpack.c.b16 %v1104, %v1102
    %v1429 = vpack.c.b16 %v1105, %v1103
    %v1430 = vpack.c.b16 %v1108, %v1106
    %v1431 = vpack.c.b16 %v1109, %v1107
    %v1432 = vpack.c.b16 %v1112, %v1110
    %v1433 = vpack.c.b16 %v1113, %v1111
    %v1434 = vpack.c.b16 %v1116, %v1114
    %v1435 = vpack.c.b16 %v1117, %v1115
    %v1436 = vpack.c.b16 %v1120, %v1118
    %v1437 = vpack.c.b16 %v1121, %v1119
    %v1438 = vpack.c.b16 %v1124, %v1122
    %v1439 = vpack.c.b16 %v1125, %v1123
    %v1440 = vpack.c.b16 %v1128, %v1126
    %v1441 = vpack.c.b16 %v1129, %v1127
    %v1442 = vpack.c.b16 %v1132, %v1130
    %v1443 = vpack.c.b16 %v1133, %v1131
    %v1444 = vpack.c.b16 %v1136, %v1134
    %v1445 = vpack.c.b16 %v1137, %v1135
    %v1446 = vpack.c.b16 %v1140, %v1138
    %v1447 = vpack.c.b16 %v1141, %v1139
    %v1448 = vpack.c.b16 %v1144, %v1142
    %v1449 = vpack.c.b16 %v1145, %v1143
    %v1450 = vpack.c.b16 %v1148, %v1146
    %v1451 = vpack.c.b16 %v1149, %v1147
    %v1452 = vpack.c.b16 %v1152, %v1150
    %v1453 = vpack.c.b16 %v1153, %v1151
    %v1454 = vpack.c.b16 %v1156, %v1154
    %v1455 = vpack.c.b16 %v1157, %v1155
    %v1456 = vpack.c.b16 %v1160, %v1158
    %v1457 = vpack.c.b16 %v1161, %v1159
    %v1458 = vpack.c.b16 %v1164, %v1162
    %v1459 = vpack.c.b16 %v1165, %v1163
    %v1460 = vpack.c.b16 %v1168, %v1166
    %v1461 = vpack.c.b16 %v1169, %v1167
    %v1462 = vpack.c.b16 %v1172, %v1170
    %v1463 = vpack.c.b16 %v1173, %v1171
    %v1464 = vpack.c.b16 %v1176, %v1174
    %v1465 = vpack.c.b16 %v1177, %v1175
    %v1466 = vpack.c.b16 %v1180, %v1178
    %v1467 = vpack.c.b16 %v1181, %v1179
    %v1468 = vpack.c.b16 %v1184, %v1182
    %v1469 = vpack.c.b16 %v1185, %v1183
    %v1470 = vpack.c.b16 %v1188, %v1186
    %v1471 = vpack.c.b16 %v1189, %v1187
    %v1472 = vpack.c.b16 %v1192, %v1190
    %v1473 = vpack.c.b16 %v1193, %v1191
    %v1474 = vpack.c.b16 %v1196, %v1194
    %v1475 = vpack.c.b16 %v1197, %v1195
    %v1476 = vpack.c.b16 %v1200, %v1198
    %v1477 = vpack.c.b16 %v1201, %v1199
    %v1478 = vpack.c.b16 %v1204, %v1202
    %v1479 = vpack.c.b16 %v1205, %v1203
    %v1480 = vpack.c.b16 %v1208, %v1206
    %v1481 = vpack.c.b16 %v1209, %v1207
    %v1482 = vpack.c.b16 %v1212, %v1210
    %v1483 = vpack.c.b16 %v1213, %v1211
    %v1484 = vpack.c.b16 %v1216, %v1214
    %v1485 = vpack.c.b16 %v1217, %v1215
    %v1486 = vpack.c.b16 %v1220, %v1218
    %v1487 = vpack.c.b16 %v1221, %v1219
    %v1488 = vpack.c.b16 %v1224, %v1222
    %v1489 = vpack.c.b16 %v1225, %v1223
    %v1490 = vpack.c.b16 %v1228, %v1226
    %v1491 = vpack.c.b16 %v1229, %v1227
    %v1492 = vpack.c.b16 %v1232, %v1230
    %v1493 = vpack.c.b16 %v1233, %v1231
    %v1494 = vpack.c.b16 %v1236, %v1234
    %v1495 = vpack.c.b16 %v1237, %v1235
    %v1496 = vpack.c.b16 %v1240, %v1238
    %v1497 = vpack.c.b16 %v1241, %v1239
    %1754 = vmatprep.subr.bf16.mxu0 %v1243
    %1755 = vmatpush1.bf16.msra.mxu0 %v1242
    %1756 = vmatprep.subr.bf16.mxu0 %v1245
    %1757 = vmatpush1.bf16.msra.mxu0 %v1244
    %1758 = vmatprep.subr.bf16.mxu0 %v1247
    %1759 = vmatpush1.bf16.msra.mxu0 %v1246
    %1760 = vmatprep.subr.bf16.mxu0 %v1249
    %1761 = vmatpush1.bf16.msra.mxu0 %v1248
    %1762 = vmatprep.subr.bf16.mxu0 %v1251
    %1763 = vmatpush1.bf16.msra.mxu0 %v1250
    %1764 = vmatprep.subr.bf16.mxu0 %v1253
    %1765 = vmatpush1.bf16.msra.mxu0 %v1252
    %1766 = vmatprep.subr.bf16.mxu0 %v1255
    %1767 = vmatpush1.bf16.msra.mxu0 %v1254
    %1768 = vmatprep.subr.bf16.mxu0 %v1257
    %1769 = vmatpush1.bf16.msra.mxu0 %v1256
    %1770 = vmatprep.subr.bf16.mxu0 %v1259
    %1771 = vmatpush1.bf16.msra.mxu0 %v1258
    %1772 = vmatprep.subr.bf16.mxu0 %v1261
    %1773 = vmatpush1.bf16.msra.mxu0 %v1260
    %1774 = vmatprep.subr.bf16.mxu0 %v1263
    %1775 = vmatpush1.bf16.msra.mxu0 %v1262
    %1776 = vmatprep.subr.bf16.mxu0 %v1265
    %1777 = vmatpush1.bf16.msra.mxu0 %v1264
    %1778 = vmatprep.subr.bf16.mxu0 %v1267
    %1779 = vmatpush1.bf16.msra.mxu0 %v1266
    %1780 = vmatprep.subr.bf16.mxu0 %v1269
    %1781 = vmatpush1.bf16.msra.mxu0 %v1268
    %1782 = vmatprep.subr.bf16.mxu0 %v1271
    %1783 = vmatpush1.bf16.msra.mxu0 %v1270
    %1784 = vmatprep.subr.bf16.mxu0 %v1273
    %1785 = vmatpush1.bf16.msra.mxu0 %v1272
    %1786 = vmatprep.mubr.bf16.mxu0 %v397
    %1787 = vmatmul.mubr.bf16.gmra.mrb[0].mxu0 %v383
    %v1788 = vpop.f32.mrb[0].mxu0
    %v1789 = vadd.f32 %v351, %v1788
    %v1790 = vpop.f32.mrb[0].mxu0
    %v1791 = vadd.f32 %v355, %v1790
    %v1792 = vpop.f32.mrb[0].mxu0
    %v1793 = vpop.f32.mrb[0].mxu0
    %1794 = vdwg.mxu0
    %1795 = vmatprep.subr.bf16.mxu0 %v1275
    %1796 = vmatpush1.bf16.msra.mxu0 %v1274
    %1797 = vmatprep.subr.bf16.mxu0 %v1277
    %1798 = vmatpush1.bf16.msra.mxu0 %v1276
    %1799 = vmatprep.subr.bf16.mxu0 %v1279
    %1800 = vmatpush1.bf16.msra.mxu0 %v1278
    %1801 = vmatprep.subr.bf16.mxu0 %v1281
    %1802 = vmatpush1.bf16.msra.mxu0 %v1280
    %1803 = vmatprep.subr.bf16.mxu0 %v1283
    %1804 = vmatpush1.bf16.msra.mxu0 %v1282
    %1805 = vmatprep.subr.bf16.mxu0 %v1285
    %1806 = vmatpush1.bf16.msra.mxu0 %v1284
    %1807 = vmatprep.subr.bf16.mxu0 %v1287
    %1808 = vmatpush1.bf16.msra.mxu0 %v1286
    %1809 = vmatprep.subr.bf16.mxu0 %v1289
    %1810 = vmatpush1.bf16.msra.mxu0 %v1288
    %1811 = vmatprep.subr.bf16.mxu0 %v1291
    %1812 = vmatpush1.bf16.msra.mxu0 %v1290
    %1813 = vmatprep.subr.bf16.mxu0 %v1293
    %1814 = vmatpush1.bf16.msra.mxu0 %v1292
    %1815 = vmatprep.subr.bf16.mxu0 %v1295
    %1816 = vmatpush1.bf16.msra.mxu0 %v1294
    %1817 = vmatprep.subr.bf16.mxu0 %v1297
    %1818 = vmatpush1.bf16.msra.mxu0 %v1296
    %1819 = vmatprep.subr.bf16.mxu0 %v1299
    %1820 = vmatpush1.bf16.msra.mxu0 %v1298
    %1821 = vmatprep.subr.bf16.mxu0 %v1301
    %1822 = vmatpush1.bf16.msra.mxu0 %v1300
    %1823 = vmatprep.subr.bf16.mxu0 %v1303
    %1824 = vmatpush1.bf16.msra.mxu0 %v1302
    %1825 = vmatprep.subr.bf16.mxu0 %v1305
    %1826 = vmatpush1.bf16.msra.mxu0 %v1304
    %1827 = vmatprep.mubr.bf16.mxu0 %v407
    %1828 = vmatmul.mubr.bf16.gmra.mrb[0].mxu0 %v405
    %v1829 = vpop.f32.mrb[0].mxu0
    %v1830 = vadd.f32 %v1789, %v1829
    %v1831 = vpop.f32.mrb[0].mxu0
    %v1832 = vadd.f32 %v1791, %v1831
    %v1833 = vpop.f32.mrb[0].mxu0
    %v1834 = vpop.f32.mrb[0].mxu0
    %1835 = vdwg.mxu0
    %1836 = vmatprep.subr.bf16.mxu0 %v1307
    %1837 = vmatpush1.bf16.msra.mxu0 %v1306
    %1838 = vmatprep.subr.bf16.mxu0 %v1309
    %1839 = vmatpush1.bf16.msra.mxu0 %v1308
    %1840 = vmatprep.subr.bf16.mxu0 %v1311
    %1841 = vmatpush1.bf16.msra.mxu0 %v1310
    %1842 = vmatprep.subr.bf16.mxu0 %v1313
    %1843 = vmatpush1.bf16.msra.mxu0 %v1312
    %1844 = vmatprep.subr.bf16.mxu0 %v1315
    %1845 = vmatpush1.bf16.msra.mxu0 %v1314
    %1846 = vmatprep.subr.bf16.mxu0 %v1317
    %1847 = vmatpush1.bf16.msra.mxu0 %v1316
    %1848 = vmatprep.subr.bf16.mxu0 %v1319
    %1849 = vmatpush1.bf16.msra.mxu0 %v1318
    %1850 = vmatprep.subr.bf16.mxu0 %v1321
    %1851 = vmatpush1.bf16.msra.mxu0 %v1320
    %1852 = vmatprep.subr.bf16.mxu0 %v1323
    %1853 = vmatpush1.bf16.msra.mxu0 %v1322
    %1854 = vmatprep.subr.bf16.mxu0 %v1325
    %1855 = vmatpush1.bf16.msra.mxu0 %v1324
    %1856 = vmatprep.subr.bf16.mxu0 %v1327
    %1857 = vmatpush1.bf16.msra.mxu0 %v1326
    %1858 = vmatprep.subr.bf16.mxu0 %v1329
    %1859 = vmatpush1.bf16.msra.mxu0 %v1328
    %1860 = vmatprep.subr.bf16.mxu0 %v1331
    %1861 = vmatpush1.bf16.msra.mxu0 %v1330
    %1862 = vmatprep.subr.bf16.mxu0 %v1333
    %1863 = vmatpush1.bf16.msra.mxu0 %v1332
    %1864 = vmatprep.subr.bf16.mxu0 %v1335
    %1865 = vmatpush1.bf16.msra.mxu0 %v1334
    %1866 = vmatprep.subr.bf16.mxu0 %v1337
    %1867 = vmatpush1.bf16.msra.mxu0 %v1336
    %1868 = vmatprep.mubr.bf16.mxu0 %v404
    %1869 = vmatmul.mubr.bf16.gmra.mrb[0].mxu0 %v390
    %v1870 = vpop.f32.mrb[0].mxu0
    %v1871 = vadd.f32 %v1830, %v1870
    %v1872 = vpop.f32.mrb[0].mxu0
    %v1873 = vadd.f32 %v1832, %v1872
    %v1874 = vpop.f32.mrb[0].mxu0
    %v1875 = vpop.f32.mrb[0].mxu0
    %1876 = vdwg.mxu0
    %1877 = vmatprep.subr.bf16.mxu0 %v1339
    %1878 = vmatpush1.bf16.msra.mxu0 %v1338
    %1879 = vmatprep.subr.bf16.mxu0 %v1341
    %1880 = vmatpush1.bf16.msra.mxu0 %v1340
    %1881 = vmatprep.subr.bf16.mxu0 %v1343
    %1882 = vmatpush1.bf16.msra.mxu0 %v1342
    %1883 = vmatprep.subr.bf16.mxu0 %v1345
    %1884 = vmatpush1.bf16.msra.mxu0 %v1344
    %1885 = vmatprep.subr.bf16.mxu0 %v1347
    %1886 = vmatpush1.bf16.msra.mxu0 %v1346
    %1887 = vmatprep.subr.bf16.mxu0 %v1349
    %1888 = vmatpush1.bf16.msra.mxu0 %v1348
    %1889 = vmatprep.subr.bf16.mxu0 %v1351
    %1890 = vmatpush1.bf16.msra.mxu0 %v1350
    %1891 = vmatprep.subr.bf16.mxu0 %v1353
    %1892 = vmatpush1.bf16.msra.mxu0 %v1352
    %1893 = vmatprep.subr.bf16.mxu0 %v1355
    %1894 = vmatpush1.bf16.msra.mxu0 %v1354
    %1895 = vmatprep.subr.bf16.mxu0 %v1357
    %1896 = vmatpush1.bf16.msra.mxu0 %v1356
    %1897 = vmatprep.subr.bf16.mxu0 %v1359
    %1898 = vmatpush1.bf16.msra.mxu0 %v1358
    %1899 = vmatprep.subr.bf16.mxu0 %v1361
    %1900 = vmatpush1.bf16.msra.mxu0 %v1360
    %1901 = vmatprep.subr.bf16.mxu0 %v1363
    %1902 = vmatpush1.bf16.msra.mxu0 %v1362
    %1903 = vmatprep.subr.bf16.mxu0 %v1365
    %1904 = vmatpush1.bf16.msra.mxu0 %v1364
    %1905 = vmatprep.subr.bf16.mxu0 %v1367
    %1906 = vmatpush1.bf16.msra.mxu0 %v1366
    %1907 = vmatprep.subr.bf16.mxu0 %v1369
    %1908 = vmatpush1.bf16.msra.mxu0 %v1368
    %1909 = vmatprep.mubr.bf16.mxu0 %v408
    %1910 = vmatmul.mubr.bf16.gmra.mrb[0].mxu0 %v406
    %v1911 = vpop.f32.mrb[0].mxu0
    %v1912 = vadd.f32 %v1871, %v1911
    %v1913 = vpop.f32.mrb[0].mxu0
    %v1914 = vadd.f32 %v1873, %v1913
    %v1915 = vpop.f32.mrb[0].mxu0
    %v1916 = vpop.f32.mrb[0].mxu0
    %1917 = vdwg.mxu0
    %1918 = vmatprep.subr.bf16.mxu0 %v1371
    %1919 = vmatpush1.bf16.msra.mxu0 %v1370
    %1920 = vmatprep.subr.bf16.mxu0 %v1373
    %1921 = vmatpush1.bf16.msra.mxu0 %v1372
    %1922 = vmatprep.subr.bf16.mxu0 %v1375
    %1923 = vmatpush1.bf16.msra.mxu0 %v1374
    %1924 = vmatprep.subr.bf16.mxu0 %v1377
    %1925 = vmatpush1.bf16.msra.mxu0 %v1376
    %1926 = vmatprep.subr.bf16.mxu0 %v1379
    %1927 = vmatpush1.bf16.msra.mxu0 %v1378
    %1928 = vmatprep.subr.bf16.mxu0 %v1381
    %1929 = vmatpush1.bf16.msra.mxu0 %v1380
    %1930 = vmatprep.subr.bf16.mxu0 %v1383
    %1931 = vmatpush1.bf16.msra.mxu0 %v1382
    %1932 = vmatprep.subr.bf16.mxu0 %v1385
    %1933 = vmatpush1.bf16.msra.mxu0 %v1384
    %1934 = vmatprep.subr.bf16.mxu0 %v1387
    %1935 = vmatpush1.bf16.msra.mxu0 %v1386
    %1936 = vmatprep.subr.bf16.mxu0 %v1389
    %1937 = vmatpush1.bf16.msra.mxu0 %v1388
    %1938 = vmatprep.subr.bf16.mxu0 %v1391
    %1939 = vmatpush1.bf16.msra.mxu0 %v1390
    %1940 = vmatprep.subr.bf16.mxu0 %v1393
    %1941 = vmatpush1.bf16.msra.mxu0 %v1392
    %1942 = vmatprep.subr.bf16.mxu0 %v1395
    %1943 = vmatpush1.bf16.msra.mxu0 %v1394
    %1944 = vmatprep.subr.bf16.mxu0 %v1397
    %1945 = vmatpush1.bf16.msra.mxu0 %v1396
    %1946 = vmatprep.subr.bf16.mxu0 %v1399
    %1947 = vmatpush1.bf16.msra.mxu0 %v1398
    %1948 = vmatprep.subr.bf16.mxu0 %v1401
    %1949 = vmatpush1.bf16.msra.mxu0 %v1400
    %1950 = vmatprep.mubr.bf16.mxu0 %v446
    %1951 = vmatmul.mubr.bf16.gmra.mrb[0].mxu0 %v432
    %v1952 = vpop.f32.mrb[0].mxu0
    %v1953 = vadd.f32 %v1912, %v1952
    %v1954 = vpop.f32.mrb[0].mxu0
    %v1955 = vadd.f32 %v1914, %v1954
    %v1956 = vpop.f32.mrb[0].mxu0
    %v1957 = vpop.f32.mrb[0].mxu0
    %1958 = vdwg.mxu0
    %1959 = vmatprep.subr.bf16.mxu0 %v1403
    %1960 = vmatpush1.bf16.msra.mxu0 %v1402
    %1961 = vmatprep.subr.bf16.mxu0 %v1405
    %1962 = vmatpush1.bf16.msra.mxu0 %v1404
    %1963 = vmatprep.subr.bf16.mxu0 %v1407
    %1964 = vmatpush1.bf16.msra.mxu0 %v1406
    %1965 = vmatprep.subr.bf16.mxu0 %v1409
    %1966 = vmatpush1.bf16.msra.mxu0 %v1408
    %1967 = vmatprep.subr.bf16.mxu0 %v1411
    %1968 = vmatpush1.bf16.msra.mxu0 %v1410
    %1969 = vmatprep.subr.bf16.mxu0 %v1413
    %1970 = vmatpush1.bf16.msra.mxu0 %v1412
    %1971 = vmatprep.subr.bf16.mxu0 %v1415
    %1972 = vmatpush1.bf16.msra.mxu0 %v1414
    %1973 = vmatprep.subr.bf16.mxu0 %v1417
    %1974 = vmatpush1.bf16.msra.mxu0 %v1416
    %1975 = vmatprep.subr.bf16.mxu0 %v1419
    %1976 = vmatpush1.bf16.msra.mxu0 %v1418
    %1977 = vmatprep.subr.bf16.mxu0 %v1421
    %1978 = vmatpush1.bf16.msra.mxu0 %v1420
    %1979 = vmatprep.subr.bf16.mxu0 %v1423
    %1980 = vmatpush1.bf16.msra.mxu0 %v1422
    %1981 = vmatprep.subr.bf16.mxu0 %v1425
    %1982 = vmatpush1.bf16.msra.mxu0 %v1424
    %1983 = vmatprep.subr.bf16.mxu0 %v1427
    %1984 = vmatpush1.bf16.msra.mxu0 %v1426
    %1985 = vmatprep.subr.bf16.mxu0 %v1429
    %1986 = vmatpush1.bf16.msra.mxu0 %v1428
    %1987 = vmatprep.subr.bf16.mxu0 %v1431
    %1988 = vmatpush1.bf16.msra.mxu0 %v1430
    %1989 = vmatprep.subr.bf16.mxu0 %v1433
    %1990 = vmatpush1.bf16.msra.mxu0 %v1432
    %1991 = vmatprep.mubr.bf16.mxu0 %v456
    %1992 = vmatmul.mubr.bf16.gmra.mrb[0].mxu0 %v454
    %v1993 = vpop.f32.mrb[0].mxu0
    %v1994 = vadd.f32 %v1953, %v1993
    %v1995 = vpop.f32.mrb[0].mxu0
    %v1996 = vadd.f32 %v1955, %v1995
    %v1997 = vpop.f32.mrb[0].mxu0
    %v1998 = vpop.f32.mrb[0].mxu0
    %1999 = vdwg.mxu0
    %2000 = vmatprep.subr.bf16.mxu0 %v1435
    %2001 = vmatpush1.bf16.msra.mxu0 %v1434
    %2002 = vmatprep.subr.bf16.mxu0 %v1437
    %2003 = vmatpush1.bf16.msra.mxu0 %v1436
    %2004 = vmatprep.subr.bf16.mxu0 %v1439
    %2005 = vmatpush1.bf16.msra.mxu0 %v1438
    %2006 = vmatprep.subr.bf16.mxu0 %v1441
    %2007 = vmatpush1.bf16.msra.mxu0 %v1440
    %2008 = vmatprep.subr.bf16.mxu0 %v1443
    %2009 = vmatpush1.bf16.msra.mxu0 %v1442
    %2010 = vmatprep.subr.bf16.mxu0 %v1445
    %2011 = vmatpush1.bf16.msra.mxu0 %v1444
    %2012 = vmatprep.subr.bf16.mxu0 %v1447
    %2013 = vmatpush1.bf16.msra.mxu0 %v1446
    %2014 = vmatprep.subr.bf16.mxu0 %v1449
    %2015 = vmatpush1.bf16.msra.mxu0 %v1448
    %2016 = vmatprep.subr.bf16.mxu0 %v1451
    %2017 = vmatpush1.bf16.msra.mxu0 %v1450
    %2018 = vmatprep.subr.bf16.mxu0 %v1453
    %2019 = vmatpush1.bf16.msra.mxu0 %v1452
    %2020 = vmatprep.subr.bf16.mxu0 %v1455
    %2021 = vmatpush1.bf16.msra.mxu0 %v1454
    %2022 = vmatprep.subr.bf16.mxu0 %v1457
    %2023 = vmatpush1.bf16.msra.mxu0 %v1456
    %2024 = vmatprep.subr.bf16.mxu0 %v1459
    %2025 = vmatpush1.bf16.msra.mxu0 %v1458
    %2026 = vmatprep.subr.bf16.mxu0 %v1461
    %2027 = vmatpush1.bf16.msra.mxu0 %v1460
    %2028 = vmatprep.subr.bf16.mxu0 %v1463
    %2029 = vmatpush1.bf16.msra.mxu0 %v1462
    %2030 = vmatprep.subr.bf16.mxu0 %v1465
    %2031 = vmatpush1.bf16.msra.mxu0 %v1464
    %2032 = vmatprep.mubr.bf16.mxu0 %v453
    %2033 = vmatmul.mubr.bf16.gmra.mrb[0].mxu0 %v439
    %v2034 = vpop.f32.mrb[0].mxu0
    %v2035 = vadd.f32 %v1994, %v2034
    %v2036 = vpop.f32.mrb[0].mxu0
    %v2037 = vadd.f32 %v1996, %v2036
    %v2038 = vpop.f32.mrb[0].mxu0
    %v2039 = vpop.f32.mrb[0].mxu0
    %2040 = vdwg.mxu0
    %2041 = vmatprep.subr.bf16.mxu0 %v1467
    %2042 = vmatpush1.bf16.msra.mxu0 %v1466
    %2043 = vmatprep.subr.bf16.mxu0 %v1469
    %2044 = vmatpush1.bf16.msra.mxu0 %v1468
    %2045 = vmatprep.subr.bf16.mxu0 %v1471
    %2046 = vmatpush1.bf16.msra.mxu0 %v1470
    %2047 = vmatprep.subr.bf16.mxu0 %v1473
    %2048 = vmatpush1.bf16.msra.mxu0 %v1472
    %2049 = vmatprep.subr.bf16.mxu0 %v1475
    %2050 = vmatpush1.bf16.msra.mxu0 %v1474
    %2051 = vmatprep.subr.bf16.mxu0 %v1477
    %2052 = vmatpush1.bf16.msra.mxu0 %v1476
    %2053 = vmatprep.subr.bf16.mxu0 %v1479
    %2054 = vmatpush1.bf16.msra.mxu0 %v1478
    %2055 = vmatprep.subr.bf16.mxu0 %v1481
    %2056 = vmatpush1.bf16.msra.mxu0 %v1480
    %2057 = vmatprep.subr.bf16.mxu0 %v1483
    %2058 = vmatpush1.bf16.msra.mxu0 %v1482
    %2059 = vmatprep.subr.bf16.mxu0 %v1485
    %2060 = vmatpush1.bf16.msra.mxu0 %v1484
    %2061 = vmatprep.subr.bf16.mxu0 %v1487
    %2062 = vmatpush1.bf16.msra.mxu0 %v1486
    %2063 = vmatprep.subr.bf16.mxu0 %v1489
    %2064 = vmatpush1.bf16.msra.mxu0 %v1488
    %2065 = vmatprep.subr.bf16.mxu0 %v1491
    %2066 = vmatpush1.bf16.msra.mxu0 %v1490
    %2067 = vmatprep.subr.bf16.mxu0 %v1493
    %2068 = vmatpush1.bf16.msra.mxu0 %v1492
    %2069 = vmatprep.subr.bf16.mxu0 %v1495
    %2070 = vmatpush1.bf16.msra.mxu0 %v1494
    %2071 = vmatprep.subr.bf16.mxu0 %v1497
    %2072 = vmatpush1.bf16.msra.mxu0 %v1496
    %2073 = vmatprep.mubr.bf16.mxu0 %v457
    %2074 = vmatmul.mubr.bf16.gmra.mrb[0].mxu0 %v455
    %v2075 = vpop.f32.mrb[0].mxu0
    %v2076 = vadd.f32 %v2035, %v2075
    %v2077 = vpop.f32.mrb[0].mxu0
    %v2078 = vadd.f32 %v2037, %v2077
    %v2079 = vpop.f32.mrb[0].mxu0
    %v2080 = vpop.f32.mrb[0].mxu0
    %2081 = vdwg.mxu0
    %v2082 = vld [vmem:[#allocation5] sm:$0xff]
    %v2083 = vld [vmem:[#allocation5 + $0x8] sm:$0xff]
    %v2084 = vld [vmem:[#allocation5 + $0x10] sm:$0xff]
    %v2085 = vld [vmem:[#allocation5 + $0x18] sm:$0xff]
    %v2086 = vld [vmem:[#allocation5 + $0x20] sm:$0xff]
    %v2087 = vld [vmem:[#allocation5 + $0x28] sm:$0xff]
    %v2088 = vld [vmem:[#allocation5 + $0x30] sm:$0xff]
    %v2089 = vld [vmem:[#allocation5 + $0x38] sm:$0xff]
    %v2090 = vld [vmem:[#allocation5 + $0x40] sm:$0xff]
    %v2091 = vld [vmem:[#allocation5 + $0x48] sm:$0xff]
    %v2092 = vld [vmem:[#allocation5 + $0x50] sm:$0xff]
    %v2093 = vld [vmem:[#allocation5 + $0x58] sm:$0xff]
    %v2094 = vld [vmem:[#allocation5 + $0x60] sm:$0xff]
    %v2095 = vld [vmem:[#allocation5 + $0x68] sm:$0xff]
    %v2096 = vld [vmem:[#allocation5 + $0x70] sm:$0xff]
    %v2097 = vld [vmem:[#allocation5 + $0x78] sm:$0xff]
    %v2098 = vld [vmem:[#allocation5 + $0x80] sm:$0xff]
    %v2099 = vld [vmem:[#allocation5 + $0x88] sm:$0xff]
    %v2100 = vld [vmem:[#allocation5 + $0x90] sm:$0xff]
    %v2101 = vld [vmem:[#allocation5 + $0x98] sm:$0xff]
    %v2102 = vld [vmem:[#allocation5 + $0xa0] sm:$0xff]
    %v2103 = vld [vmem:[#allocation5 + $0xa8] sm:$0xff]
    %v2104 = vld [vmem:[#allocation5 + $0xb0] sm:$0xff]
    %v2105 = vld [vmem:[#allocation5 + $0xb8] sm:$0xff]
    %v2106 = vld [vmem:[#allocation5 + $0xc0] sm:$0xff]
    %v2107 = vld [vmem:[#allocation5 + $0xc8] sm:$0xff]
    %v2108 = vld [vmem:[#allocation5 + $0xd0] sm:$0xff]
    %v2109 = vld [vmem:[#allocation5 + $0xd8] sm:$0xff]
    %v2110 = vld [vmem:[#allocation5 + $0xe0] sm:$0xff]
    %v2111 = vld [vmem:[#allocation5 + $0xe8] sm:$0xff]
    %v2112 = vld [vmem:[#allocation5 + $0xf0] sm:$0xff]
    %v2113 = vld [vmem:[#allocation5 + $0xf8] sm:$0xff]
    %v2114 = vld [vmem:[#allocation5 + $0x100] sm:$0xff]
    %v2115 = vld [vmem:[#allocation5 + $0x108] sm:$0xff]
    %v2116 = vld [vmem:[#allocation5 + $0x110] sm:$0xff]
    %v2117 = vld [vmem:[#allocation5 + $0x118] sm:$0xff]
    %v2118 = vld [vmem:[#allocation5 + $0x120] sm:$0xff]
    %v2119 = vld [vmem:[#allocation5 + $0x128] sm:$0xff]
    %v2120 = vld [vmem:[#allocation5 + $0x130] sm:$0xff]
    %v2121 = vld [vmem:[#allocation5 + $0x138] sm:$0xff]
    %v2122 = vld [vmem:[#allocation5 + $0x140] sm:$0xff]
    %v2123 = vld [vmem:[#allocation5 + $0x148] sm:$0xff]
    %v2124 = vld [vmem:[#allocation5 + $0x150] sm:$0xff]
    %v2125 = vld [vmem:[#allocation5 + $0x158] sm:$0xff]
    %v2126 = vld [vmem:[#allocation5 + $0x160] sm:$0xff]
    %v2127 = vld [vmem:[#allocation5 + $0x168] sm:$0xff]
    %v2128 = vld [vmem:[#allocation5 + $0x170] sm:$0xff]
    %v2129 = vld [vmem:[#allocation5 + $0x178] sm:$0xff]
    %v2130 = vld [vmem:[#allocation5 + $0x180] sm:$0xff]
    %v2131 = vld [vmem:[#allocation5 + $0x188] sm:$0xff]
    %v2132 = vld [vmem:[#allocation5 + $0x190] sm:$0xff]
    %v2133 = vld [vmem:[#allocation5 + $0x198] sm:$0xff]
    %v2134 = vld [vmem:[#allocation5 + $0x1a0] sm:$0xff]
    %v2135 = vld [vmem:[#allocation5 + $0x1a8] sm:$0xff]
    %v2136 = vld [vmem:[#allocation5 + $0x1b0] sm:$0xff]
    %v2137 = vld [vmem:[#allocation5 + $0x1b8] sm:$0xff]
    %v2138 = vld [vmem:[#allocation5 + $0x1c0] sm:$0xff]
    %v2139 = vld [vmem:[#allocation5 + $0x1c8] sm:$0xff]
    %v2140 = vld [vmem:[#allocation5 + $0x1d0] sm:$0xff]
    %v2141 = vld [vmem:[#allocation5 + $0x1d8] sm:$0xff]
    %v2142 = vld [vmem:[#allocation5 + $0x1e0] sm:$0xff]
    %v2143 = vld [vmem:[#allocation5 + $0x1e8] sm:$0xff]
    %v2144 = vld [vmem:[#allocation5 + $0x1f0] sm:$0xff]
    %v2145 = vld [vmem:[#allocation5 + $0x1f8] sm:$0xff]
    %v2146 = vld [vmem:[#allocation5 + $0x200] sm:$0xff]
    %v2147 = vld [vmem:[#allocation5 + $0x208] sm:$0xff]
    %v2148 = vld [vmem:[#allocation5 + $0x210] sm:$0xff]
    %v2149 = vld [vmem:[#allocation5 + $0x218] sm:$0xff]
    %v2150 = vld [vmem:[#allocation5 + $0x220] sm:$0xff]
    %v2151 = vld [vmem:[#allocation5 + $0x228] sm:$0xff]
    %v2152 = vld [vmem:[#allocation5 + $0x230] sm:$0xff]
    %v2153 = vld [vmem:[#allocation5 + $0x238] sm:$0xff]
    %v2154 = vld [vmem:[#allocation5 + $0x240] sm:$0xff]
    %v2155 = vld [vmem:[#allocation5 + $0x248] sm:$0xff]
    %v2156 = vld [vmem:[#allocation5 + $0x250] sm:$0xff]
    %v2157 = vld [vmem:[#allocation5 + $0x258] sm:$0xff]
    %v2158 = vld [vmem:[#allocation5 + $0x260] sm:$0xff]
    %v2159 = vld [vmem:[#allocation5 + $0x268] sm:$0xff]
    %v2160 = vld [vmem:[#allocation5 + $0x270] sm:$0xff]
    %v2161 = vld [vmem:[#allocation5 + $0x278] sm:$0xff]
    %v2162 = vld [vmem:[#allocation5 + $0x280] sm:$0xff]
    %v2163 = vld [vmem:[#allocation5 + $0x288] sm:$0xff]
    %v2164 = vld [vmem:[#allocation5 + $0x290] sm:$0xff]
    %v2165 = vld [vmem:[#allocation5 + $0x298] sm:$0xff]
    %v2166 = vld [vmem:[#allocation5 + $0x2a0] sm:$0xff]
    %v2167 = vld [vmem:[#allocation5 + $0x2a8] sm:$0xff]
    %v2168 = vld [vmem:[#allocation5 + $0x2b0] sm:$0xff]
    %v2169 = vld [vmem:[#allocation5 + $0x2b8] sm:$0xff]
    %v2170 = vld [vmem:[#allocation5 + $0x2c0] sm:$0xff]
    %v2171 = vld [vmem:[#allocation5 + $0x2c8] sm:$0xff]
    %v2172 = vld [vmem:[#allocation5 + $0x2d0] sm:$0xff]
    %v2173 = vld [vmem:[#allocation5 + $0x2d8] sm:$0xff]
    %v2174 = vld [vmem:[#allocation5 + $0x2e0] sm:$0xff]
    %v2175 = vld [vmem:[#allocation5 + $0x2e8] sm:$0xff]
    %v2176 = vld [vmem:[#allocation5 + $0x2f0] sm:$0xff]
    %v2177 = vld [vmem:[#allocation5 + $0x2f8] sm:$0xff]
    %s2178 = scalar_lea.vmem %s6, 1
    %v2179 = vld [vmem:[%s2178] ss:$4 sm:$0x3]
    %v2181 = vlaneseq
    %v2182 = vshrl.u32 %v2181, 7
    %v2183 = vsub.s32 0, %v2182
    %v2184 = vrot.slane %v2179, %v2183
    %v2185 = vlaneseq
    %v2186 = vshrl.u32 %v2185, 7
    %v2187 = vsub.s32 1, %v2186
    %v2188 = vrot.slane %v2179, %v2187
    %v2192 = vcombine.high %v89, %v89
    %v2194 = vunpack.c.l.s4 1966171168
    %v2195 = vunpack.c.0.s8 %v2194
    %v2196 = vlaneseq
    %v2197 = vshrl.u32 %v2196, 7
    %v2198 = vsub.s32 %v2195, %v2197
    %v2199 = vrot.slane %v89, %v2198
    %v2201 = vunpack.c.l.s4 1966171168
    %v2202 = vunpack.c.0.s8 %v2201
    %v2203 = vlaneseq
    %v2204 = vshrl.u32 %v2203, 7
    %v2205 = vsub.s32 %v2202, %v2204
    %v2206 = vrot.slane %v2192, %v2205
    %v2207 = vcombine.high %v2199, %v2199
    %v2208 = vcombine.high %v2206, %v2206
    %v2210 = vunpack.c.l.s4 1966171168
    %v2211 = vunpack.c.0.s8 %v2210
    %v2212 = vlaneseq
    %v2213 = vshrl.u32 %v2212, 7
    %v2214 = vsub.s32 %v2211, %v2213
    %v2215 = vrot.slane %v2199, %v2214
    %v2217 = vunpack.c.l.s4 1966171168
    %v2218 = vunpack.c.0.s8 %v2217
    %v2219 = vlaneseq
    %v2220 = vshrl.u32 %v2219, 7
    %v2221 = vsub.s32 %v2218, %v2220
    %v2222 = vrot.slane %v2206, %v2221
    %v2224 = vunpack.c.l.s4 1966171168
    %v2225 = vunpack.c.0.s8 %v2224
    %v2226 = vlaneseq
    %v2227 = vshrl.u32 %v2226, 7
    %v2228 = vsub.s32 %v2225, %v2227
    %v2229 = vrot.slane %v2207, %v2228
    %v2231 = vunpack.c.l.s4 1966171168
    %v2232 = vunpack.c.0.s8 %v2231
    %v2233 = vlaneseq
    %v2234 = vshrl.u32 %v2233, 7
    %v2235 = vsub.s32 %v2232, %v2234
    %v2236 = vrot.slane %v2208, %v2235
    %v2237 = vcombine.high %v2215, %v2215
    %v2238 = vcombine.high %v2229, %v2229
    %v2341 = vunpack.c.l.b16 %v2082
    %v2342 = vunpack.c.h.b16 %v2082
    %v2343 = vunpack.c.l.b16 %v2083
    %v2344 = vunpack.c.h.b16 %v2083
    %v2345 = vunpack.c.l.b16 %v2084
    %v2346 = vunpack.c.h.b16 %v2084
    %v2347 = vunpack.c.l.b16 %v2085
    %v2348 = vunpack.c.h.b16 %v2085
    %v2349 = vunpack.c.l.b16 %v2086
    %v2350 = vunpack.c.h.b16 %v2086
    %v2351 = vunpack.c.l.b16 %v2087
    %v2352 = vunpack.c.h.b16 %v2087
    %v2353 = vunpack.c.l.b16 %v2088
    %v2354 = vunpack.c.h.b16 %v2088
    %v2355 = vunpack.c.l.b16 %v2089
    %v2356 = vunpack.c.h.b16 %v2089
    %v2357 = vunpack.c.l.b16 %v2090
    %v2358 = vunpack.c.h.b16 %v2090
    %v2359 = vunpack.c.l.b16 %v2091
    %v2360 = vunpack.c.h.b16 %v2091
    %v2361 = vunpack.c.l.b16 %v2092
    %v2362 = vunpack.c.h.b16 %v2092
    %v2363 = vunpack.c.l.b16 %v2093
    %v2364 = vunpack.c.h.b16 %v2093
    %v2365 = vunpack.c.l.b16 %v2094
    %v2366 = vunpack.c.h.b16 %v2094
    %v2367 = vunpack.c.l.b16 %v2095
    %v2368 = vunpack.c.h.b16 %v2095
    %v2369 = vunpack.c.l.b16 %v2096
    %v2370 = vunpack.c.h.b16 %v2096
    %v2371 = vunpack.c.l.b16 %v2097
    %v2372 = vunpack.c.h.b16 %v2097
    %v2373 = vunpack.c.l.b16 %v2098
    %v2374 = vunpack.c.h.b16 %v2098
    %v2375 = vunpack.c.l.b16 %v2099
    %v2376 = vunpack.c.h.b16 %v2099
    %v2377 = vunpack.c.l.b16 %v2100
    %v2378 = vunpack.c.h.b16 %v2100
    %v2379 = vunpack.c.l.b16 %v2101
    %v2380 = vunpack.c.h.b16 %v2101
    %v2381 = vunpack.c.l.b16 %v2102
    %v2382 = vunpack.c.h.b16 %v2102
    %v2383 = vunpack.c.l.b16 %v2103
    %v2384 = vunpack.c.h.b16 %v2103
    %v2385 = vunpack.c.l.b16 %v2104
    %v2386 = vunpack.c.h.b16 %v2104
    %v2387 = vunpack.c.l.b16 %v2105
    %v2388 = vunpack.c.h.b16 %v2105
    %v2389 = vunpack.c.l.b16 %v2106
    %v2390 = vunpack.c.h.b16 %v2106
    %v2391 = vunpack.c.l.b16 %v2107
    %v2392 = vunpack.c.h.b16 %v2107
    %v2393 = vunpack.c.l.b16 %v2108
    %v2394 = vunpack.c.h.b16 %v2108
    %v2395 = vunpack.c.l.b16 %v2109
    %v2396 = vunpack.c.h.b16 %v2109
    %v2397 = vunpack.c.l.b16 %v2110
    %v2398 = vunpack.c.h.b16 %v2110
    %v2399 = vunpack.c.l.b16 %v2111
    %v2400 = vunpack.c.h.b16 %v2111
    %v2401 = vunpack.c.l.b16 %v2112
    %v2402 = vunpack.c.h.b16 %v2112
    %v2403 = vunpack.c.l.b16 %v2113
    %v2404 = vunpack.c.h.b16 %v2113
    %v2405 = vunpack.c.l.b16 %v2114
    %v2406 = vunpack.c.h.b16 %v2114
    %v2407 = vunpack.c.l.b16 %v2115
    %v2408 = vunpack.c.h.b16 %v2115
    %v2409 = vunpack.c.l.b16 %v2116
    %v2410 = vunpack.c.h.b16 %v2116
    %v2411 = vunpack.c.l.b16 %v2117
    %v2412 = vunpack.c.h.b16 %v2117
    %v2413 = vunpack.c.l.b16 %v2118
    %v2414 = vunpack.c.h.b16 %v2118
    %v2415 = vunpack.c.l.b16 %v2119
    %v2416 = vunpack.c.h.b16 %v2119
    %v2417 = vunpack.c.l.b16 %v2120
    %v2418 = vunpack.c.h.b16 %v2120
    %v2419 = vunpack.c.l.b16 %v2121
    %v2420 = vunpack.c.h.b16 %v2121
    %v2421 = vunpack.c.l.b16 %v2122
    %v2422 = vunpack.c.h.b16 %v2122
    %v2423 = vunpack.c.l.b16 %v2123
    %v2424 = vunpack.c.h.b16 %v2123
    %v2425 = vunpack.c.l.b16 %v2124
    %v2426 = vunpack.c.h.b16 %v2124
    %v2427 = vunpack.c.l.b16 %v2125
    %v2428 = vunpack.c.h.b16 %v2125
    %v2429 = vunpack.c.l.b16 %v2126
    %v2430 = vunpack.c.h.b16 %v2126
    %v2431 = vunpack.c.l.b16 %v2127
    %v2432 = vunpack.c.h.b16 %v2127
    %v2433 = vunpack.c.l.b16 %v2128
    %v2434 = vunpack.c.h.b16 %v2128
    %v2435 = vunpack.c.l.b16 %v2129
    %v2436 = vunpack.c.h.b16 %v2129
    %v2437 = vunpack.c.l.b16 %v2130
    %v2438 = vunpack.c.h.b16 %v2130
    %v2439 = vunpack.c.l.b16 %v2131
    %v2440 = vunpack.c.h.b16 %v2131
    %v2441 = vunpack.c.l.b16 %v2132
    %v2442 = vunpack.c.h.b16 %v2132
    %v2443 = vunpack.c.l.b16 %v2133
    %v2444 = vunpack.c.h.b16 %v2133
    %v2445 = vunpack.c.l.b16 %v2134
    %v2446 = vunpack.c.h.b16 %v2134
    %v2447 = vunpack.c.l.b16 %v2135
    %v2448 = vunpack.c.h.b16 %v2135
    %v2449 = vunpack.c.l.b16 %v2136
    %v2450 = vunpack.c.h.b16 %v2136
    %v2451 = vunpack.c.l.b16 %v2137
    %v2452 = vunpack.c.h.b16 %v2137
    %v2453 = vunpack.c.l.b16 %v2138
    %v2454 = vunpack.c.h.b16 %v2138
    %v2455 = vunpack.c.l.b16 %v2139
    %v2456 = vunpack.c.h.b16 %v2139
    %v2457 = vunpack.c.l.b16 %v2140
    %v2458 = vunpack.c.h.b16 %v2140
    %v2459 = vunpack.c.l.b16 %v2141
    %v2460 = vunpack.c.h.b16 %v2141
    %v2461 = vunpack.c.l.b16 %v2142
    %v2462 = vunpack.c.h.b16 %v2142
    %v2463 = vunpack.c.l.b16 %v2143
    %v2464 = vunpack.c.h.b16 %v2143
    %v2465 = vunpack.c.l.b16 %v2144
    %v2466 = vunpack.c.h.b16 %v2144
    %v2467 = vunpack.c.l.b16 %v2145
    %v2468 = vunpack.c.h.b16 %v2145
    %v2469 = vunpack.c.l.b16 %v2146
    %v2470 = vunpack.c.h.b16 %v2146
    %v2471 = vunpack.c.l.b16 %v2147
    %v2472 = vunpack.c.h.b16 %v2147
    %v2473 = vunpack.c.l.b16 %v2148
    %v2474 = vunpack.c.h.b16 %v2148
    %v2475 = vunpack.c.l.b16 %v2149
    %v2476 = vunpack.c.h.b16 %v2149
    %v2477 = vunpack.c.l.b16 %v2150
    %v2478 = vunpack.c.h.b16 %v2150
    %v2479 = vunpack.c.l.b16 %v2151
    %v2480 = vunpack.c.h.b16 %v2151
    %v2481 = vunpack.c.l.b16 %v2152
    %v2482 = vunpack.c.h.b16 %v2152
    %v2483 = vunpack.c.l.b16 %v2153
    %v2484 = vunpack.c.h.b16 %v2153
    %v2485 = vunpack.c.l.b16 %v2154
    %v2486 = vunpack.c.h.b16 %v2154
    %v2487 = vunpack.c.l.b16 %v2155
    %v2488 = vunpack.c.h.b16 %v2155
    %v2489 = vunpack.c.l.b16 %v2156
    %v2490 = vunpack.c.h.b16 %v2156
    %v2491 = vunpack.c.l.b16 %v2157
    %v2492 = vunpack.c.h.b16 %v2157
    %v2493 = vunpack.c.l.b16 %v2158
    %v2494 = vunpack.c.h.b16 %v2158
    %v2495 = vunpack.c.l.b16 %v2159
    %v2496 = vunpack.c.h.b16 %v2159
    %v2497 = vunpack.c.l.b16 %v2160
    %v2498 = vunpack.c.h.b16 %v2160
    %v2499 = vunpack.c.l.b16 %v2161
    %v2500 = vunpack.c.h.b16 %v2161
    %v2501 = vunpack.c.l.b16 %v2162
    %v2502 = vunpack.c.h.b16 %v2162
    %v2503 = vunpack.c.l.b16 %v2163
    %v2504 = vunpack.c.h.b16 %v2163
    %v2505 = vunpack.c.l.b16 %v2164
    %v2506 = vunpack.c.h.b16 %v2164
    %v2507 = vunpack.c.l.b16 %v2165
    %v2508 = vunpack.c.h.b16 %v2165
    %v2509 = vunpack.c.l.b16 %v2166
    %v2510 = vunpack.c.h.b16 %v2166
    %v2511 = vunpack.c.l.b16 %v2167
    %v2512 = vunpack.c.h.b16 %v2167
    %v2513 = vunpack.c.l.b16 %v2168
    %v2514 = vunpack.c.h.b16 %v2168
    %v2515 = vunpack.c.l.b16 %v2169
    %v2516 = vunpack.c.h.b16 %v2169
    %v2517 = vunpack.c.l.b16 %v2170
    %v2518 = vunpack.c.h.b16 %v2170
    %v2519 = vunpack.c.l.b16 %v2171
    %v2520 = vunpack.c.h.b16 %v2171
    %v2521 = vunpack.c.l.b16 %v2172
    %v2522 = vunpack.c.h.b16 %v2172
    %v2523 = vunpack.c.l.b16 %v2173
    %v2524 = vunpack.c.h.b16 %v2173
    %v2525 = vunpack.c.l.b16 %v2174
    %v2526 = vunpack.c.h.b16 %v2174
    %v2527 = vunpack.c.l.b16 %v2175
    %v2528 = vunpack.c.h.b16 %v2175
    %v2529 = vunpack.c.l.b16 %v2176
    %v2530 = vunpack.c.h.b16 %v2176
    %v2531 = vunpack.c.l.b16 %v2177
    %v2532 = vunpack.c.h.b16 %v2177
    %v2533 = vpack.c.b16 %v2343, %v2341
    %v2534 = vpack.c.b16 %v2344, %v2342
    %v2535 = vpack.c.b16 %v2347, %v2345
    %v2536 = vpack.c.b16 %v2348, %v2346
    %v2537 = vpack.c.b16 %v2351, %v2349
    %v2538 = vpack.c.b16 %v2352, %v2350
    %v2539 = vpack.c.b16 %v2355, %v2353
    %v2540 = vpack.c.b16 %v2356, %v2354
    %v2541 = vpack.c.b16 %v2359, %v2357
    %v2542 = vpack.c.b16 %v2360, %v2358
    %v2543 = vpack.c.b16 %v2363, %v2361
    %v2544 = vpack.c.b16 %v2364, %v2362
    %v2545 = vpack.c.b16 %v2367, %v2365
    %v2546 = vpack.c.b16 %v2368, %v2366
    %v2547 = vpack.c.b16 %v2371, %v2369
    %v2548 = vpack.c.b16 %v2372, %v2370
    %v2549 = vpack.c.b16 %v2375, %v2373
    %v2550 = vpack.c.b16 %v2376, %v2374
    %v2551 = vpack.c.b16 %v2379, %v2377
    %v2552 = vpack.c.b16 %v2380, %v2378
    %v2553 = vpack.c.b16 %v2383, %v2381
    %v2554 = vpack.c.b16 %v2384, %v2382
    %v2555 = vpack.c.b16 %v2387, %v2385
    %v2556 = vpack.c.b16 %v2388, %v2386
    %v2557 = vpack.c.b16 %v2391, %v2389
    %v2558 = vpack.c.b16 %v2392, %v2390
    %v2559 = vpack.c.b16 %v2395, %v2393
    %v2560 = vpack.c.b16 %v2396, %v2394
    %v2561 = vpack.c.b16 %v2399, %v2397
    %v2562 = vpack.c.b16 %v2400, %v2398
    %v2563 = vpack.c.b16 %v2403, %v2401
    %v2564 = vpack.c.b16 %v2404, %v2402
    %v2565 = vpack.c.b16 %v2407, %v2405
    %v2566 = vpack.c.b16 %v2408, %v2406
    %v2567 = vpack.c.b16 %v2411, %v2409
    %v2568 = vpack.c.b16 %v2412, %v2410
    %v2569 = vpack.c.b16 %v2415, %v2413
    %v2570 = vpack.c.b16 %v2416, %v2414
    %v2571 = vpack.c.b16 %v2419, %v2417
    %v2572 = vpack.c.b16 %v2420, %v2418
    %v2573 = vpack.c.b16 %v2423, %v2421
    %v2574 = vpack.c.b16 %v2424, %v2422
    %v2575 = vpack.c.b16 %v2427, %v2425
    %v2576 = vpack.c.b16 %v2428, %v2426
    %v2577 = vpack.c.b16 %v2431, %v2429
    %v2578 = vpack.c.b16 %v2432, %v2430
    %v2579 = vpack.c.b16 %v2435, %v2433
    %v2580 = vpack.c.b16 %v2436, %v2434
    %v2581 = vpack.c.b16 %v2439, %v2437
    %v2582 = vpack.c.b16 %v2440, %v2438
    %v2583 = vpack.c.b16 %v2443, %v2441
    %v2584 = vpack.c.b16 %v2444, %v2442
    %v2585 = vpack.c.b16 %v2447, %v2445
    %v2586 = vpack.c.b16 %v2448, %v2446
    %v2587 = vpack.c.b16 %v2451, %v2449
    %v2588 = vpack.c.b16 %v2452, %v2450
    %v2589 = vpack.c.b16 %v2455, %v2453
    %v2590 = vpack.c.b16 %v2456, %v2454
    %v2591 = vpack.c.b16 %v2459, %v2457
    %v2592 = vpack.c.b16 %v2460, %v2458
    %v2593 = vpack.c.b16 %v2463, %v2461
    %v2594 = vpack.c.b16 %v2464, %v2462
    %v2595 = vpack.c.b16 %v2467, %v2465
    %v2596 = vpack.c.b16 %v2468, %v2466
    %v2597 = vpack.c.b16 %v2471, %v2469
    %v2598 = vpack.c.b16 %v2472, %v2470
    %v2599 = vpack.c.b16 %v2475, %v2473
    %v2600 = vpack.c.b16 %v2476, %v2474
    %v2601 = vpack.c.b16 %v2479, %v2477
    %v2602 = vpack.c.b16 %v2480, %v2478
    %v2603 = vpack.c.b16 %v2483, %v2481
    %v2604 = vpack.c.b16 %v2484, %v2482
    %v2605 = vpack.c.b16 %v2487, %v2485
    %v2606 = vpack.c.b16 %v2488, %v2486
    %v2607 = vpack.c.b16 %v2491, %v2489
    %v2608 = vpack.c.b16 %v2492, %v2490
    %v2609 = vpack.c.b16 %v2495, %v2493
    %v2610 = vpack.c.b16 %v2496, %v2494
    %v2611 = vpack.c.b16 %v2499, %v2497
    %v2612 = vpack.c.b16 %v2500, %v2498
    %v2613 = vpack.c.b16 %v2503, %v2501
    %v2614 = vpack.c.b16 %v2504, %v2502
    %v2615 = vpack.c.b16 %v2507, %v2505
    %v2616 = vpack.c.b16 %v2508, %v2506
    %v2617 = vpack.c.b16 %v2511, %v2509
    %v2618 = vpack.c.b16 %v2512, %v2510
    %v2619 = vpack.c.b16 %v2515, %v2513
    %v2620 = vpack.c.b16 %v2516, %v2514
    %v2621 = vpack.c.b16 %v2519, %v2517
    %v2622 = vpack.c.b16 %v2520, %v2518
    %v2623 = vpack.c.b16 %v2523, %v2521
    %v2624 = vpack.c.b16 %v2524, %v2522
    %v2625 = vpack.c.b16 %v2527, %v2525
    %v2626 = vpack.c.b16 %v2528, %v2526
    %v2627 = vpack.c.b16 %v2531, %v2529
    %v2628 = vpack.c.b16 %v2532, %v2530
    %2725 = vmatprep.subr.bf16.mxu0 %v2534
    %2726 = vmatpush1.bf16.msra.mxu0 %v2533
    %2727 = vmatprep.subr.bf16.mxu0 %v2536
    %2728 = vmatpush1.bf16.msra.mxu0 %v2535
    %2729 = vmatprep.subr.bf16.mxu0 %v2538
    %2730 = vmatpush1.bf16.msra.mxu0 %v2537
    %2731 = vmatprep.subr.bf16.mxu0 %v2540
    %2732 = vmatpush1.bf16.msra.mxu0 %v2539
    %2733 = vmatprep.subr.bf16.mxu0 %v2542
    %2734 = vmatpush1.bf16.msra.mxu0 %v2541
    %2735 = vmatprep.subr.bf16.mxu0 %v2544
    %2736 = vmatpush1.bf16.msra.mxu0 %v2543
    %2737 = vmatprep.subr.bf16.mxu0 %v2546
    %2738 = vmatpush1.bf16.msra.mxu0 %v2545
    %2739 = vmatprep.subr.bf16.mxu0 %v2548
    %2740 = vmatpush1.bf16.msra.mxu0 %v2547
    %2741 = vmatprep.subr.bf16.mxu0 %v2550
    %2742 = vmatpush1.bf16.msra.mxu0 %v2549
    %2743 = vmatprep.subr.bf16.mxu0 %v2552
    %2744 = vmatpush1.bf16.msra.mxu0 %v2551
    %2745 = vmatprep.subr.bf16.mxu0 %v2554
    %2746 = vmatpush1.bf16.msra.mxu0 %v2553
    %2747 = vmatprep.subr.bf16.mxu0 %v2556
    %2748 = vmatpush1.bf16.msra.mxu0 %v2555
    %2749 = vmatprep.subr.bf16.mxu0 %v2558
    %2750 = vmatpush1.bf16.msra.mxu0 %v2557
    %2751 = vmatprep.subr.bf16.mxu0 %v2560
    %2752 = vmatpush1.bf16.msra.mxu0 %v2559
    %2753 = vmatprep.subr.bf16.mxu0 %v2562
    %2754 = vmatpush1.bf16.msra.mxu0 %v2561
    %2755 = vmatprep.subr.bf16.mxu0 %v2564
    %2756 = vmatpush1.bf16.msra.mxu0 %v2563
    %2757 = vmatprep.mubr.bf16.mxu0 %v2229
    %2758 = vmatmul.mubr.bf16.gmra.mrb[0].mxu0 %v2215
    %v2759 = vpop.f32.mrb[0].mxu0
    %v2760 = vadd.f32 %v2184, %v2759
    %v2761 = vpop.f32.mrb[0].mxu0
    %v2762 = vadd.f32 %v2188, %v2761
    %v2763 = vpop.f32.mrb[0].mxu0
    %v2764 = vpop.f32.mrb[0].mxu0
    %2765 = vdwg.mxu0
    %2766 = vmatprep.subr.bf16.mxu0 %v2566
    %2767 = vmatpush1.bf16.msra.mxu0 %v2565
    %2768 = vmatprep.subr.bf16.mxu0 %v2568
    %2769 = vmatpush1.bf16.msra.mxu0 %v2567
    %2770 = vmatprep.subr.bf16.mxu0 %v2570
    %2771 = vmatpush1.bf16.msra.mxu0 %v2569
    %2772 = vmatprep.subr.bf16.mxu0 %v2572
    %2773 = vmatpush1.bf16.msra.mxu0 %v2571
    %2774 = vmatprep.subr.bf16.mxu0 %v2574
    %2775 = vmatpush1.bf16.msra.mxu0 %v2573
    %2776 = vmatprep.subr.bf16.mxu0 %v2576
    %2777 = vmatpush1.bf16.msra.mxu0 %v2575
    %2778 = vmatprep.subr.bf16.mxu0 %v2578
    %2779 = vmatpush1.bf16.msra.mxu0 %v2577
    %2780 = vmatprep.subr.bf16.mxu0 %v2580
    %2781 = vmatpush1.bf16.msra.mxu0 %v2579
    %2782 = vmatprep.subr.bf16.mxu0 %v2582
    %2783 = vmatpush1.bf16.msra.mxu0 %v2581
    %2784 = vmatprep.subr.bf16.mxu0 %v2584
    %2785 = vmatpush1.bf16.msra.mxu0 %v2583
    %2786 = vmatprep.subr.bf16.mxu0 %v2586
    %2787 = vmatpush1.bf16.msra.mxu0 %v2585
    %2788 = vmatprep.subr.bf16.mxu0 %v2588
    %2789 = vmatpush1.bf16.msra.mxu0 %v2587
    %2790 = vmatprep.subr.bf16.mxu0 %v2590
    %2791 = vmatpush1.bf16.msra.mxu0 %v2589
    %2792 = vmatprep.subr.bf16.mxu0 %v2592
    %2793 = vmatpush1.bf16.msra.mxu0 %v2591
    %2794 = vmatprep.subr.bf16.mxu0 %v2594
    %2795 = vmatpush1.bf16.msra.mxu0 %v2593
    %2796 = vmatprep.subr.bf16.mxu0 %v2596
    %2797 = vmatpush1.bf16.msra.mxu0 %v2595
    %2798 = vmatprep.mubr.bf16.mxu0 %v2238
    %2799 = vmatmul.mubr.bf16.gmra.mrb[0].mxu0 %v2237
    %v2800 = vpop.f32.mrb[0].mxu0
    %v2801 = vadd.f32 %v2760, %v2800
    %v2802 = vpop.f32.mrb[0].mxu0
    %v2803 = vadd.f32 %v2762, %v2802
    %v2804 = vpop.f32.mrb[0].mxu0
    %v2805 = vpop.f32.mrb[0].mxu0
    %2806 = vdwg.mxu0
    %2807 = vmatprep.subr.bf16.mxu0 %v2598
    %2808 = vmatpush1.bf16.msra.mxu0 %v2597
    %2809 = vmatprep.subr.bf16.mxu0 %v2600
    %2810 = vmatpush1.bf16.msra.mxu0 %v2599
    %2811 = vmatprep.subr.bf16.mxu0 %v2602
    %2812 = vmatpush1.bf16.msra.mxu0 %v2601
    %2813 = vmatprep.subr.bf16.mxu0 %v2604
    %2814 = vmatpush1.bf16.msra.mxu0 %v2603
    %2815 = vmatprep.subr.bf16.mxu0 %v2606
    %2816 = vmatpush1.bf16.msra.mxu0 %v2605
    %2817 = vmatprep.subr.bf16.mxu0 %v2608
    %2818 = vmatpush1.bf16.msra.mxu0 %v2607
    %2819 = vmatprep.subr.bf16.mxu0 %v2610
    %2820 = vmatpush1.bf16.msra.mxu0 %v2609
    %2821 = vmatprep.subr.bf16.mxu0 %v2612
    %2822 = vmatpush1.bf16.msra.mxu0 %v2611
    %2823 = vmatprep.subr.bf16.mxu0 %v2614
    %2824 = vmatpush1.bf16.msra.mxu0 %v2613
    %2825 = vmatprep.subr.bf16.mxu0 %v2616
    %2826 = vmatpush1.bf16.msra.mxu0 %v2615
    %2827 = vmatprep.subr.bf16.mxu0 %v2618
    %2828 = vmatpush1.bf16.msra.mxu0 %v2617
    %2829 = vmatprep.subr.bf16.mxu0 %v2620
    %2830 = vmatpush1.bf16.msra.mxu0 %v2619
    %2831 = vmatprep.subr.bf16.mxu0 %v2622
    %2832 = vmatpush1.bf16.msra.mxu0 %v2621
    %2833 = vmatprep.subr.bf16.mxu0 %v2624
    %2834 = vmatpush1.bf16.msra.mxu0 %v2623
    %2835 = vmatprep.subr.bf16.mxu0 %v2626
    %2836 = vmatpush1.bf16.msra.mxu0 %v2625
    %2837 = vmatprep.subr.bf16.mxu0 %v2628
    %2838 = vmatpush1.bf16.msra.mxu0 %v2627
    %2839 = vmatprep.mubr.bf16.mxu0 %v2236
    %2840 = vmatmul.mubr.bf16.gmra.mrb[0].mxu0 %v2222
    %v2841 = vpop.f32.mrb[0].mxu0
    %v2842 = vadd.f32 %v2801, %v2841
    %v2843 = vpop.f32.mrb[0].mxu0
    %v2844 = vadd.f32 %v2803, %v2843
    %v2845 = vpop.f32.mrb[0].mxu0
    %v2846 = vpop.f32.mrb[0].mxu0
    %2847 = vdwg.mxu0
    %v2848 = vmax.f32 %v2076, 0.0
    %v2849 = vmax.f32 %v2842, 0.0
    %v2850 = vadd.f32 %v2078, %v2844
    %v2851 = vmax.f32 %v2850, 0.0
    %2852 = vst [vmem:[#allocation11] sm:$0x3] %v2848
    %2853 = vst [vmem:[#allocation10] sm:$0x3] %v2849
    %v2854 = vpack.c.bf16 %v2851, %v2851
    %v2855 = vld [vmem:[#allocation7] sm:$0xf]
    %v2856 = vld [vmem:[#allocation7 + $0xc] sm:$0xf]
    %v2857 = vld [vmem:[#allocation7 + $0x18] sm:$0xf]
    %v2858 = vld [vmem:[#allocation7 + $0x24] sm:$0xf]
    %v2859 = vld [vmem:[#allocation7 + $0x30] sm:$0xf]
    %v2860 = vld [vmem:[#allocation7 + $0x3c] sm:$0xf]
    %v2861 = vld [vmem:[#allocation7 + $0x48] sm:$0xf]
    %v2862 = vld [vmem:[#allocation7 + $0x54] sm:$0xf]
    %v2863 = vld [vmem:[#allocation7 + $0x60] sm:$0xf]
    %v2864 = vld [vmem:[#allocation7 + $0x6c] sm:$0xf]
    %v2865 = vld [vmem:[#allocation7 + $0x78] sm:$0xf]
    %v2866 = vld [vmem:[#allocation7 + $0x84] sm:$0xf]
    %v2867 = vld [vmem:[#allocation7 + $0x90] sm:$0xf]
    %v2868 = vld [vmem:[#allocation7 + $0x9c] sm:$0xf]
    %v2869 = vld [vmem:[#allocation7 + $0xa8] sm:$0xf]
    %v2870 = vld [vmem:[#allocation7 + $0xb4] sm:$0xf]
    %v2887 = vunpack.c.l.b16 %v2855
    %v2888 = vunpack.c.l.b16 %v2856
    %v2889 = vunpack.c.l.b16 %v2857
    %v2890 = vunpack.c.l.b16 %v2858
    %v2891 = vunpack.c.l.b16 %v2859
    %v2892 = vunpack.c.l.b16 %v2860
    %v2893 = vunpack.c.l.b16 %v2861
    %v2894 = vunpack.c.l.b16 %v2862
    %v2895 = vunpack.c.l.b16 %v2863
    %v2896 = vunpack.c.l.b16 %v2864
    %v2897 = vunpack.c.l.b16 %v2865
    %v2898 = vunpack.c.l.b16 %v2866
    %v2899 = vunpack.c.l.b16 %v2867
    %v2900 = vunpack.c.l.b16 %v2868
    %v2901 = vunpack.c.l.b16 %v2869
    %v2902 = vunpack.c.l.b16 %v2870
    %v2903 = vpack.c.b16 %v2888, %v2887
    %v2904 = vpack.c.b16 %v2890, %v2889
    %v2905 = vpack.c.b16 %v2892, %v2891
    %v2906 = vpack.c.b16 %v2894, %v2893
    %v2907 = vpack.c.b16 %v2896, %v2895
    %v2908 = vpack.c.b16 %v2898, %v2897
    %v2909 = vpack.c.b16 %v2900, %v2899
    %v2910 = vpack.c.b16 %v2902, %v2901
    %2919 = vmatprep.subr.bf16.mxu0 0
    %2920 = vmatpush1.bf16.msra.mxu0 %v2903
    %2921 = vmatprep.subr.bf16.mxu0 0
    %2922 = vmatpush1.bf16.msra.mxu0 %v2904
    %2923 = vmatprep.subr.bf16.mxu0 0
    %2924 = vmatpush1.bf16.msra.mxu0 %v2905
    %2925 = vmatprep.subr.bf16.mxu0 0
    %2926 = vmatpush1.bf16.msra.mxu0 %v2906
    %2927 = vmatprep.subr.bf16.mxu0 0
    %2928 = vmatpush1.bf16.msra.mxu0 %v2907
    %2929 = vmatprep.subr.bf16.mxu0 0
    %2930 = vmatpush1.bf16.msra.mxu0 %v2908
    %2931 = vmatprep.subr.bf16.mxu0 0
    %2932 = vmatpush1.bf16.msra.mxu0 %v2909
    %2933 = vmatprep.subr.bf16.mxu0 0
    %2934 = vmatpush1.bf16.msra.mxu0 %v2910
    %2935 = vmatprep.subr.bf16.mxu0 0
    %2936 = vmatpush1.bf16.msra.mxu0 0
    %2937 = vmatprep.subr.bf16.mxu0 0
    %2938 = vmatpush1.bf16.msra.mxu0 0
    %2939 = vmatprep.subr.bf16.mxu0 0
    %2940 = vmatpush1.bf16.msra.mxu0 0
    %2941 = vmatprep.subr.bf16.mxu0 0
    %2942 = vmatpush1.bf16.msra.mxu0 0
    %2943 = vmatprep.subr.bf16.mxu0 0
    %2944 = vmatpush1.bf16.msra.mxu0 0
    %2945 = vmatprep.subr.bf16.mxu0 0
    %2946 = vmatpush1.bf16.msra.mxu0 0
    %2947 = vmatprep.subr.bf16.mxu0 0
    %2948 = vmatpush1.bf16.msra.mxu0 0
    %2949 = vmatprep.subr.bf16.mxu0 0
    %2950 = vmatpush1.bf16.msra.mxu0 0
    %2951 = vmatprep.mubr.bf16.mxu0 0
    %2952 = vmatmul.mubr.bf16.gmra.mrb[0].mxu0 %v2854
    %v2953 = vpop.f32.mrb[0].mxu0
    %v2954 = vadd.f32 0.0, %v2953
    %v2955 = vpop.f32.mrb[0].mxu0
    %v2956 = vpop.f32.mrb[0].mxu0
    %v2957 = vpop.f32.mrb[0].mxu0
    %2958 = vdwg.mxu0
    %v2959 = vpack.c.bf16 %v2849, %v2849
    %v2960 = vld [vmem:[#allocation7 + $0x4] sm:$0xf]
    %v2961 = vld [vmem:[#allocation7 + $0x10] sm:$0xf]
    %v2962 = vld [vmem:[#allocation7 + $0x1c] sm:$0xf]
    %v2963 = vld [vmem:[#allocation7 + $0x28] sm:$0xf]
    %v2964 = vld [vmem:[#allocation7 + $0x34] sm:$0xf]
    %v2965 = vld [vmem:[#allocation7 + $0x40] sm:$0xf]
    %v2966 = vld [vmem:[#allocation7 + $0x4c] sm:$0xf]
    %v2967 = vld [vmem:[#allocation7 + $0x58] sm:$0xf]
    %v2968 = vld [vmem:[#allocation7 + $0x64] sm:$0xf]
    %v2969 = vld [vmem:[#allocation7 + $0x70] sm:$0xf]
    %v2970 = vld [vmem:[#allocation7 + $0x7c] sm:$0xf]
    %v2971 = vld [vmem:[#allocation7 + $0x88] sm:$0xf]
    %v2972 = vld [vmem:[#allocation7 + $0x94] sm:$0xf]
    %v2973 = vld [vmem:[#allocation7 + $0xa0] sm:$0xf]
    %v2974 = vld [vmem:[#allocation7 + $0xac] sm:$0xf]
    %v2975 = vld [vmem:[#allocation7 + $0xb8] sm:$0xf]
    %v2992 = vunpack.c.l.b16 %v2960
    %v2993 = vunpack.c.l.b16 %v2961
    %v2994 = vunpack.c.l.b16 %v2962
    %v2995 = vunpack.c.l.b16 %v2963
    %v2996 = vunpack.c.l.b16 %v2964
    %v2997 = vunpack.c.l.b16 %v2965
    %v2998 = vunpack.c.l.b16 %v2966
    %v2999 = vunpack.c.l.b16 %v2967
    %v3000 = vunpack.c.l.b16 %v2968
    %v3001 = vunpack.c.l.b16 %v2969
    %v3002 = vunpack.c.l.b16 %v2970
    %v3003 = vunpack.c.l.b16 %v2971
    %v3004 = vunpack.c.l.b16 %v2972
    %v3005 = vunpack.c.l.b16 %v2973
    %v3006 = vunpack.c.l.b16 %v2974
    %v3007 = vunpack.c.l.b16 %v2975
    %v3008 = vpack.c.b16 %v2993, %v2992
    %v3009 = vpack.c.b16 %v2995, %v2994
    %v3010 = vpack.c.b16 %v2997, %v2996
    %v3011 = vpack.c.b16 %v2999, %v2998
    %v3012 = vpack.c.b16 %v3001, %v3000
    %v3013 = vpack.c.b16 %v3003, %v3002
    %v3014 = vpack.c.b16 %v3005, %v3004
    %v3015 = vpack.c.b16 %v3007, %v3006
    %3024 = vmatprep.subr.bf16.mxu0 0
    %3025 = vmatpush1.bf16.msra.mxu0 %v3008
    %3026 = vmatprep.subr.bf16.mxu0 0
    %3027 = vmatpush1.bf16.msra.mxu0 %v3009
    %3028 = vmatprep.subr.bf16.mxu0 0
    %3029 = vmatpush1.bf16.msra.mxu0 %v3010
    %3030 = vmatprep.subr.bf16.mxu0 0
    %3031 = vmatpush1.bf16.msra.mxu0 %v3011
    %3032 = vmatprep.subr.bf16.mxu0 0
    %3033 = vmatpush1.bf16.msra.mxu0 %v3012
    %3034 = vmatprep.subr.bf16.mxu0 0
    %3035 = vmatpush1.bf16.msra.mxu0 %v3013
    %3036 = vmatprep.subr.bf16.mxu0 0
    %3037 = vmatpush1.bf16.msra.mxu0 %v3014
    %3038 = vmatprep.subr.bf16.mxu0 0
    %3039 = vmatpush1.bf16.msra.mxu0 %v3015
    %3040 = vmatprep.subr.bf16.mxu0 0
    %3041 = vmatpush1.bf16.msra.mxu0 0
    %3042 = vmatprep.subr.bf16.mxu0 0
    %3043 = vmatpush1.bf16.msra.mxu0 0
    %3044 = vmatprep.subr.bf16.mxu0 0
    %3045 = vmatpush1.bf16.msra.mxu0 0
    %3046 = vmatprep.subr.bf16.mxu0 0
    %3047 = vmatpush1.bf16.msra.mxu0 0
    %3048 = vmatprep.subr.bf16.mxu0 0
    %3049 = vmatpush1.bf16.msra.mxu0 0
    %3050 = vmatprep.subr.bf16.mxu0 0
    %3051 = vmatpush1.bf16.msra.mxu0 0
    %3052 = vmatprep.subr.bf16.mxu0 0
    %3053 = vmatpush1.bf16.msra.mxu0 0
    %3054 = vmatprep.subr.bf16.mxu0 0
    %3055 = vmatpush1.bf16.msra.mxu0 0
    %3056 = vmatprep.mubr.bf16.mxu0 0
    %3057 = vmatmul.mubr.bf16.gmra.mrb[0].mxu0 %v2959
    %v3058 = vpop.f32.mrb[0].mxu0
    %v3059 = vadd.f32 0.0, %v3058
    %v3060 = vpop.f32.mrb[0].mxu0
    %v3061 = vpop.f32.mrb[0].mxu0
    %v3062 = vpop.f32.mrb[0].mxu0
    %3063 = vdwg.mxu0
    %v3064 = vpack.c.bf16 %v2848, %v2848
    %v3065 = vld [vmem:[#allocation7 + $0x8] sm:$0xf]
    %v3066 = vld [vmem:[#allocation7 + $0x14] sm:$0xf]
    %v3067 = vld [vmem:[#allocation7 + $0x20] sm:$0xf]
    %v3068 = vld [vmem:[#allocation7 + $0x2c] sm:$0xf]
    %v3069 = vld [vmem:[#allocation7 + $0x38] sm:$0xf]
    %v3070 = vld [vmem:[#allocation7 + $0x44] sm:$0xf]
    %v3071 = vld [vmem:[#allocation7 + $0x50] sm:$0xf]
    %v3072 = vld [vmem:[#allocation7 + $0x5c] sm:$0xf]
    %v3073 = vld [vmem:[#allocation7 + $0x68] sm:$0xf]
    %v3074 = vld [vmem:[#allocation7 + $0x74] sm:$0xf]
    %v3075 = vld [vmem:[#allocation7 + $0x80] sm:$0xf]
    %v3076 = vld [vmem:[#allocation7 + $0x8c] sm:$0xf]
    %v3077 = vld [vmem:[#allocation7 + $0x98] sm:$0xf]
    %v3078 = vld [vmem:[#allocation7 + $0xa4] sm:$0xf]
    %v3079 = vld [vmem:[#allocation7 + $0xb0] sm:$0xf]
    %v3080 = vld [vmem:[#allocation7 + $0xbc] sm:$0xf]
    %v3097 = vunpack.c.l.b16 %v3065
    %v3098 = vunpack.c.l.b16 %v3066
    %v3099 = vunpack.c.l.b16 %v3067
    %v3100 = vunpack.c.l.b16 %v3068
    %v3101 = vunpack.c.l.b16 %v3069
    %v3102 = vunpack.c.l.b16 %v3070
    %v3103 = vunpack.c.l.b16 %v3071
    %v3104 = vunpack.c.l.b16 %v3072
    %v3105 = vunpack.c.l.b16 %v3073
    %v3106 = vunpack.c.l.b16 %v3074
    %v3107 = vunpack.c.l.b16 %v3075
    %v3108 = vunpack.c.l.b16 %v3076
    %v3109 = vunpack.c.l.b16 %v3077
    %v3110 = vunpack.c.l.b16 %v3078
    %v3111 = vunpack.c.l.b16 %v3079
    %v3112 = vunpack.c.l.b16 %v3080
    %v3113 = vpack.c.b16 %v3098, %v3097
    %v3114 = vpack.c.b16 %v3100, %v3099
    %v3115 = vpack.c.b16 %v3102, %v3101
    %v3116 = vpack.c.b16 %v3104, %v3103
    %v3117 = vpack.c.b16 %v3106, %v3105
    %v3118 = vpack.c.b16 %v3108, %v3107
    %v3119 = vpack.c.b16 %v3110, %v3109
    %v3120 = vpack.c.b16 %v3112, %v3111
    %3129 = vmatprep.subr.bf16.mxu0 0
    %3130 = vmatpush1.bf16.msra.mxu0 %v3113
    %3131 = vmatprep.subr.bf16.mxu0 0
    %3132 = vmatpush1.bf16.msra.mxu0 %v3114
    %3133 = vmatprep.subr.bf16.mxu0 0
    %3134 = vmatpush1.bf16.msra.mxu0 %v3115
    %3135 = vmatprep.subr.bf16.mxu0 0
    %3136 = vmatpush1.bf16.msra.mxu0 %v3116
    %3137 = vmatprep.subr.bf16.mxu0 0
    %3138 = vmatpush1.bf16.msra.mxu0 %v3117
    %3139 = vmatprep.subr.bf16.mxu0 0
    %3140 = vmatpush1.bf16.msra.mxu0 %v3118
    %3141 = vmatprep.subr.bf16.mxu0 0
    %3142 = vmatpush1.bf16.msra.mxu0 %v3119
    %3143 = vmatprep.subr.bf16.mxu0 0
    %3144 = vmatpush1.bf16.msra.mxu0 %v3120
    %3145 = vmatprep.subr.bf16.mxu0 0
    %3146 = vmatpush1.bf16.msra.mxu0 0
    %3147 = vmatprep.subr.bf16.mxu0 0
    %3148 = vmatpush1.bf16.msra.mxu0 0
    %3149 = vmatprep.subr.bf16.mxu0 0
    %3150 = vmatpush1.bf16.msra.mxu0 0
    %3151 = vmatprep.subr.bf16.mxu0 0
    %3152 = vmatpush1.bf16.msra.mxu0 0
    %3153 = vmatprep.subr.bf16.mxu0 0
    %3154 = vmatpush1.bf16.msra.mxu0 0
    %3155 = vmatprep.subr.bf16.mxu0 0
    %3156 = vmatpush1.bf16.msra.mxu0 0
    %3157 = vmatprep.subr.bf16.mxu0 0
    %3158 = vmatpush1.bf16.msra.mxu0 0
    %3159 = vmatprep.subr.bf16.mxu0 0
    %3160 = vmatpush1.bf16.msra.mxu0 0
    %3161 = vmatprep.mubr.bf16.mxu0 0
    %3162 = vmatmul.mubr.bf16.gmra.mrb[0].mxu0 %v3064
    %v3163 = vpop.f32.mrb[0].mxu0
    %v3164 = vadd.f32 0.0, %v3163
    %v3165 = vpop.f32.mrb[0].mxu0
    %v3166 = vpop.f32.mrb[0].mxu0
    %v3167 = vpop.f32.mrb[0].mxu0
    %3168 = vdwg.mxu0
    %s3169 = scalar_lea.vmem %s6, 2
    %v3170 = vld [vmem:[%s3169] ss:$4 sm:$0x7]
    %v3172 = vlaneseq
    %v3173 = vshrl.u32 %v3172, 7
    %v3174 = vsub.s32 0, %v3173
    %v3175 = vrot.slane %v3170, %v3174
    %v3176 = vlaneseq
    %v3177 = vshrl.u32 %v3176, 7
    %v3178 = vsub.s32 1, %v3177
    %v3179 = vrot.slane %v3170, %v3178
    %v3180 = vlaneseq
    %v3181 = vshrl.u32 %v3180, 7
    %v3182 = vsub.s32 2, %v3181
    %v3183 = vrot.slane %v3170, %v3182
    %v3187 = vadd.f32 %v2954, %v3175
    %v3188 = vadd.f32 %v3059, %v3179
    %v3189 = vadd.f32 %v3164, %v3183
    %v3190 = vmax.f32 %v3187, 0.0
    %v3191 = vmax.f32 %v3188, 0.0
    %v3192 = vmax.f32 %v3189, 0.0
    %v3193 = vpack.c.bf16 %v3190, %v3190
    %v3194 = vpack.c.bf16 %v3191, %v3191
    %v3195 = vpack.c.bf16 %v3192, %v3192
    %v3196 = vld [vmem:[#allocation8] sm:$0xf]
    %v3197 = vld [vmem:[#allocation8 + $0x4] sm:$0xf]
    %v3198 = vld [vmem:[#allocation8 + $0x8] sm:$0xf]
    %v3199 = vld [vmem:[#allocation8 + $0xc] sm:$0xf]
    %v3200 = vld [vmem:[#allocation8 + $0x10] sm:$0xf]
    %v3201 = vld [vmem:[#allocation8 + $0x14] sm:$0xf]
    %v3202 = vld [vmem:[#allocation8 + $0x18] sm:$0xf]
    %v3203 = vld [vmem:[#allocation8 + $0x1c] sm:$0xf]
    %v3204 = vld [vmem:[#allocation8 + $0x20] sm:$0xf]
    %v3205 = vld [vmem:[#allocation8 + $0x24] sm:$0xf]
    %v3206 = vld [vmem:[#allocation8 + $0x28] sm:$0xf]
    %v3207 = vld [vmem:[#allocation8 + $0x2c] sm:$0xf]
    %v3208 = vld [vmem:[#allocation8 + $0x30] sm:$0xf]
    %v3209 = vld [vmem:[#allocation8 + $0x34] sm:$0xf]
    %v3210 = vld [vmem:[#allocation8 + $0x38] sm:$0xf]
    %v3211 = vld [vmem:[#allocation8 + $0x3c] sm:$0xf]
    %v3212 = vld [vmem:[#allocation8 + $0x40] sm:$0xf]
    %v3213 = vld [vmem:[#allocation8 + $0x44] sm:$0xf]
    %v3214 = vld [vmem:[#allocation8 + $0x48] sm:$0xf]
    %v3215 = vld [vmem:[#allocation8 + $0x4c] sm:$0xf]
    %v3216 = vld [vmem:[#allocation8 + $0x50] sm:$0xf]
    %v3217 = vld [vmem:[#allocation8 + $0x54] sm:$0xf]
    %v3218 = vld [vmem:[#allocation8 + $0x58] sm:$0xf]
    %v3219 = vld [vmem:[#allocation8 + $0x5c] sm:$0xf]
    %v3220 = vld [vmem:[#allocation8 + $0x60] sm:$0xf]
    %v3221 = vld [vmem:[#allocation8 + $0x64] sm:$0xf]
    %v3222 = vld [vmem:[#allocation8 + $0x68] sm:$0xf]
    %v3223 = vld [vmem:[#allocation8 + $0x6c] sm:$0xf]
    %v3224 = vld [vmem:[#allocation8 + $0x70] sm:$0xf]
    %v3225 = vld [vmem:[#allocation8 + $0x74] sm:$0xf]
    %v3226 = vld [vmem:[#allocation8 + $0x78] sm:$0xf]
    %v3227 = vld [vmem:[#allocation8 + $0x7c] sm:$0xf]
    %v3228 = vld [vmem:[#allocation8 + $0x80] sm:$0xf]
    %v3229 = vld [vmem:[#allocation8 + $0x84] sm:$0xf]
    %v3230 = vld [vmem:[#allocation8 + $0x88] sm:$0xf]
    %v3231 = vld [vmem:[#allocation8 + $0x8c] sm:$0xf]
    %v3232 = vld [vmem:[#allocation8 + $0x90] sm:$0xf]
    %v3233 = vld [vmem:[#allocation8 + $0x94] sm:$0xf]
    %v3234 = vld [vmem:[#allocation8 + $0x98] sm:$0xf]
    %v3235 = vld [vmem:[#allocation8 + $0x9c] sm:$0xf]
    %v3236 = vld [vmem:[#allocation8 + $0xa0] sm:$0xf]
    %v3237 = vld [vmem:[#allocation8 + $0xa4] sm:$0xf]
    %v3238 = vld [vmem:[#allocation8 + $0xa8] sm:$0xf]
    %v3239 = vld [vmem:[#allocation8 + $0xac] sm:$0xf]
    %v3240 = vld [vmem:[#allocation8 + $0xb0] sm:$0xf]
    %v3241 = vld [vmem:[#allocation8 + $0xb4] sm:$0xf]
    %v3242 = vld [vmem:[#allocation8 + $0xb8] sm:$0xf]
    %v3243 = vld [vmem:[#allocation8 + $0xbc] sm:$0xf]
    %v3244 = vld [vmem:[%s6 + $0x3] sm:$0x1]
    %v3245 = vlaneseq
    %v3246 = vshrl.u32 %v3245, 7
    %v3247 = vsub.s32 0, %v3246
    %v3248 = vrot.slane %v3244, %v3247
    %v3297 = vunpack.c.l.b16 %v3196
    %v3298 = vunpack.c.l.b16 %v3197
    %v3299 = vunpack.c.l.b16 %v3198
    %v3300 = vunpack.c.l.b16 %v3199
    %v3301 = vunpack.c.l.b16 %v3200
    %v3302 = vunpack.c.l.b16 %v3201
    %v3303 = vunpack.c.l.b16 %v3202
    %v3304 = vunpack.c.l.b16 %v3203
    %v3305 = vunpack.c.l.b16 %v3204
    %v3306 = vunpack.c.l.b16 %v3205
    %v3307 = vunpack.c.l.b16 %v3206
    %v3308 = vunpack.c.l.b16 %v3207
    %v3309 = vunpack.c.l.b16 %v3208
    %v3310 = vunpack.c.l.b16 %v3209
    %v3311 = vunpack.c.l.b16 %v3210
    %v3312 = vunpack.c.l.b16 %v3211
    %v3313 = vunpack.c.l.b16 %v3212
    %v3314 = vunpack.c.l.b16 %v3213
    %v3315 = vunpack.c.l.b16 %v3214
    %v3316 = vunpack.c.l.b16 %v3215
    %v3317 = vunpack.c.l.b16 %v3216
    %v3318 = vunpack.c.l.b16 %v3217
    %v3319 = vunpack.c.l.b16 %v3218
    %v3320 = vunpack.c.l.b16 %v3219
    %v3321 = vunpack.c.l.b16 %v3220
    %v3322 = vunpack.c.l.b16 %v3221
    %v3323 = vunpack.c.l.b16 %v3222
    %v3324 = vunpack.c.l.b16 %v3223
    %v3325 = vunpack.c.l.b16 %v3224
    %v3326 = vunpack.c.l.b16 %v3225
    %v3327 = vunpack.c.l.b16 %v3226
    %v3328 = vunpack.c.l.b16 %v3227
    %v3329 = vunpack.c.l.b16 %v3228
    %v3330 = vunpack.c.l.b16 %v3229
    %v3331 = vunpack.c.l.b16 %v3230
    %v3332 = vunpack.c.l.b16 %v3231
    %v3333 = vunpack.c.l.b16 %v3232
    %v3334 = vunpack.c.l.b16 %v3233
    %v3335 = vunpack.c.l.b16 %v3234
    %v3336 = vunpack.c.l.b16 %v3235
    %v3337 = vunpack.c.l.b16 %v3236
    %v3338 = vunpack.c.l.b16 %v3237
    %v3339 = vunpack.c.l.b16 %v3238
    %v3340 = vunpack.c.l.b16 %v3239
    %v3341 = vunpack.c.l.b16 %v3240
    %v3342 = vunpack.c.l.b16 %v3241
    %v3343 = vunpack.c.l.b16 %v3242
    %v3344 = vunpack.c.l.b16 %v3243
    %v3345 = vpack.c.b16 %v3298, %v3297
    %v3346 = vpack.c.b16 %v3300, %v3299
    %v3347 = vpack.c.b16 %v3302, %v3301
    %v3348 = vpack.c.b16 %v3304, %v3303
    %v3349 = vpack.c.b16 %v3306, %v3305
    %v3350 = vpack.c.b16 %v3308, %v3307
    %v3351 = vpack.c.b16 %v3310, %v3309
    %v3352 = vpack.c.b16 %v3312, %v3311
    %v3353 = vpack.c.b16 %v3314, %v3313
    %v3354 = vpack.c.b16 %v3316, %v3315
    %v3355 = vpack.c.b16 %v3318, %v3317
    %v3356 = vpack.c.b16 %v3320, %v3319
    %v3357 = vpack.c.b16 %v3322, %v3321
    %v3358 = vpack.c.b16 %v3324, %v3323
    %v3359 = vpack.c.b16 %v3326, %v3325
    %v3360 = vpack.c.b16 %v3328, %v3327
    %v3361 = vpack.c.b16 %v3330, %v3329
    %v3362 = vpack.c.b16 %v3332, %v3331
    %v3363 = vpack.c.b16 %v3334, %v3333
    %v3364 = vpack.c.b16 %v3336, %v3335
    %v3365 = vpack.c.b16 %v3338, %v3337
    %v3366 = vpack.c.b16 %v3340, %v3339
    %v3367 = vpack.c.b16 %v3342, %v3341
    %v3368 = vpack.c.b16 %v3344, %v3343
    %3393 = vmatprep.subr.bf16.mxu0 0
    %3394 = vmatpush1.bf16.msra.mxu0 %v3345
    %3395 = vmatprep.subr.bf16.mxu0 0
    %3396 = vmatpush1.bf16.msra.mxu0 %v3346
    %3397 = vmatprep.subr.bf16.mxu0 0
    %3398 = vmatpush1.bf16.msra.mxu0 %v3347
    %3399 = vmatprep.subr.bf16.mxu0 0
    %3400 = vmatpush1.bf16.msra.mxu0 %v3348
    %3401 = vmatprep.subr.bf16.mxu0 0
    %3402 = vmatpush1.bf16.msra.mxu0 %v3349
    %3403 = vmatprep.subr.bf16.mxu0 0
    %3404 = vmatpush1.bf16.msra.mxu0 %v3350
    %3405 = vmatprep.subr.bf16.mxu0 0
    %3406 = vmatpush1.bf16.msra.mxu0 %v3351
    %3407 = vmatprep.subr.bf16.mxu0 0
    %3408 = vmatpush1.bf16.msra.mxu0 %v3352
    %3409 = vmatprep.subr.bf16.mxu0 0
    %3410 = vmatpush1.bf16.msra.mxu0 %v3353
    %3411 = vmatprep.subr.bf16.mxu0 0
    %3412 = vmatpush1.bf16.msra.mxu0 %v3354
    %3413 = vmatprep.subr.bf16.mxu0 0
    %3414 = vmatpush1.bf16.msra.mxu0 %v3355
    %3415 = vmatprep.subr.bf16.mxu0 0
    %3416 = vmatpush1.bf16.msra.mxu0 %v3356
    %3417 = vmatprep.subr.bf16.mxu0 0
    %3418 = vmatpush1.bf16.msra.mxu0 %v3357
    %3419 = vmatprep.subr.bf16.mxu0 0
    %3420 = vmatpush1.bf16.msra.mxu0 %v3358
    %3421 = vmatprep.subr.bf16.mxu0 0
    %3422 = vmatpush1.bf16.msra.mxu0 %v3359
    %3423 = vmatprep.subr.bf16.mxu0 0
    %3424 = vmatpush1.bf16.msra.mxu0 %v3360
    %3425 = vmatprep.mubr.bf16.mxu0 %v3194
    %3426 = vmatmul.mubr.bf16.gmra.mrb[0].mxu0 %v3193
    %v3427 = vpop.f32.mrb[0].mxu0
    %v3428 = vadd.f32 %v3248, %v3427
    %v3429 = vpop.f32.mrb[0].mxu0
    %v3430 = vpop.f32.mrb[0].mxu0
    %v3431 = vpop.f32.mrb[0].mxu0
    %3432 = vdwg.mxu0
    %3433 = vmatprep.subr.bf16.mxu0 0
    %3434 = vmatpush1.bf16.msra.mxu0 %v3361
    %3435 = vmatprep.subr.bf16.mxu0 0
    %3436 = vmatpush1.bf16.msra.mxu0 %v3362
    %3437 = vmatprep.subr.bf16.mxu0 0
    %3438 = vmatpush1.bf16.msra.mxu0 %v3363
    %3439 = vmatprep.subr.bf16.mxu0 0
    %3440 = vmatpush1.bf16.msra.mxu0 %v3364
    %3441 = vmatprep.subr.bf16.mxu0 0
    %3442 = vmatpush1.bf16.msra.mxu0 %v3365
    %3443 = vmatprep.subr.bf16.mxu0 0
    %3444 = vmatpush1.bf16.msra.mxu0 %v3366
    %3445 = vmatprep.subr.bf16.mxu0 0
    %3446 = vmatpush1.bf16.msra.mxu0 %v3367
    %3447 = vmatprep.subr.bf16.mxu0 0
    %3448 = vmatpush1.bf16.msra.mxu0 %v3368
    %3449 = vmatprep.subr.bf16.mxu0 0
    %3450 = vmatpush1.bf16.msra.mxu0 0
    %3451 = vmatprep.subr.bf16.mxu0 0
    %3452 = vmatpush1.bf16.msra.mxu0 0
    %3453 = vmatprep.subr.bf16.mxu0 0
    %3454 = vmatpush1.bf16.msra.mxu0 0
    %3455 = vmatprep.subr.bf16.mxu0 0
    %3456 = vmatpush1.bf16.msra.mxu0 0
    %3457 = vmatprep.subr.bf16.mxu0 0
    %3458 = vmatpush1.bf16.msra.mxu0 0
    %3459 = vmatprep.subr.bf16.mxu0 0
    %3460 = vmatpush1.bf16.msra.mxu0 0
    %3461 = vmatprep.subr.bf16.mxu0 0
    %3462 = vmatpush1.bf16.msra.mxu0 0
    %3463 = vmatprep.subr.bf16.mxu0 0
    %3464 = vmatpush1.bf16.msra.mxu0 0
    %3465 = vmatprep.mubr.bf16.mxu0 0
    %3466 = vmatmul.mubr.bf16.gmra.mrb[0].mxu0 %v3195
    %v3467 = vpop.f32.mrb[0].mxu0
    %v3468 = vadd.f32 %v3428, %v3467
    %v3469 = vpop.f32.mrb[0].mxu0
    %v3470 = vpop.f32.mrb[0].mxu0
    %v3471 = vpop.f32.mrb[0].mxu0
    %3472 = vdwg.mxu0
    %3473 = vst [vmem:[%s9] sm:$0x3] %v3468
    // Predicated region
    $region46: #{self_mm_forward.1} parent=1 // pred_check
      _
    $region47: #{self_mm_forward.1} parent=1 // pred_check_branch
      %3475 = sbr.rel (0) target = $region49
    $region48: #{self_mm_forward.1} parent=1 // pred_region
      %s3477 = ssub.s32 32, 32
      %3478 = vsyncadd [#allocation4], %s3477
      %s3480 = sshll.u32 [#allocation10], 4
      %s3481 = int_to_ptr.vmem [resolvable:$true] %s3480
      %3483 = dma.vmem_to_hbm [thread:$0]  %s3481, 32, %s7, [#allocation4]
    $region49: #{self_mm_forward.1} parent=1 // pred_fallthru
      _
    // Predicated region
    $region50: #{self_mm_forward.1} parent=1 // pred_check
      _
    $region51: #{self_mm_forward.1} parent=1 // pred_check_branch
      %3485 = sbr.rel (0) target = $region53
    $region52: #{self_mm_forward.1} parent=1 // pred_region
      %s3487 = ssub.s32 32, 32
      %3488 = vsyncadd [#allocation12], %s3487
      %s3490 = sshll.u32 [#allocation11], 4
      %s3491 = int_to_ptr.vmem [resolvable:$true] %s3490
      %3493 = dma.vmem_to_hbm [thread:$0]  %s3491, 32, %s8, [#allocation12]
    $region53: #{self_mm_forward.1} parent=1 // pred_fallthru
      _
    // Predicated region
    $region54: #{self_mm_forward.1} parent=1 // pred_check
      _
    $region55: #{self_mm_forward.1} parent=1 // pred_check_branch
      %3495 = sbr.rel (0) target = $region57
    $region56: #{self_mm_forward.1} parent=1 // pred_region
      _
    $region57: #{self_mm_forward.1} parent=1 // pred_fallthru
      _
    // Predicated region
    $region58: #{self_mm_forward.1} parent=1 // pred_check
      _
    $region59: #{self_mm_forward.1} parent=1 // pred_check_branch
      %3497 = sbr.rel (0) target = $region61
    $region60: #{self_mm_forward.1} parent=1 // pred_region
      %3498 = dma.done [#allocation4], 32
    $region61: #{self_mm_forward.1} parent=1 // pred_fallthru
      _
    // Predicated region
    $region62: #{self_mm_forward.1} parent=1 // pred_check
      _
    $region63: #{self_mm_forward.1} parent=1 // pred_check_branch
      %3500 = sbr.rel (0) target = $region65
    $region64: #{self_mm_forward.1} parent=1 // pred_region
      %3501 = dma.done [#allocation12], 32
    $region65: #{self_mm_forward.1} parent=1 // pred_fallthru
      _
    // Predicated region
    $region66: #{self_mm_forward.1} parent=1 // pred_check
      _
    $region67: #{self_mm_forward.1} parent=1 // pred_check_branch
      %3503 = sbr.rel (0) target = $region69
    $region68: #{self_mm_forward.1} parent=1 // pred_region
      _
    $region69: #{self_mm_forward.1} parent=1 // pred_fallthru
      _
    %3504 = vsyncpa [#allocation3], 1
    %3505 = vsyncpa [#allocation6], 1
    %3506 = vsyncpa [#allocation9], 1
    %3507 = vsyncpa [#allocation4], 1
    %3508 = vsyncpa [#allocation12], 1

</llo_original>
